<compile_context>
chip_gen: v7x
topology: tpu7x:2x2x1
jax: 0.10.0
libtpu: 0.0.40
codegen_flags: <defaults>
</compile_context>

<pallas_src>
import functools

import jax
import jax.numpy as jnp
from jax.experimental import pallas as pl
from jax.experimental.pallas import tpu as pltpu

EPS = 1e-5
LANES = 128
MATMUL_DTYPE = jnp.bfloat16        # MXU-native on v5e/v6e/v7x; accumulation stays f32.


def _round_up(x, m):
    return (x + m - 1) // m * m


def _pad_channels(cout):
    # Lane-dense output channels: <=128 -> 128; above that pad toward the 256-wide
    # MXU of v6e/v7x (common UNet widths 128/256/512/1024 are unchanged).
    if cout <= LANES:
        return LANES
    return _round_up(cout, 2 * LANES)


def _vmem_budgets():
    """(vmem_limit_bytes, per-step working-set budget) -- generation aware."""
    try:
        cap = pltpu.get_tpu_info().vmem_capacity_bytes
    except Exception:                              # conservative fallback
        cap = 64 * 1024 * 1024
    if cap >= 100 * 1024 * 1024:                   # v5e / v6e: 128 MiB physical
        return 96 * 1024 * 1024, 32 * 1024 * 1024
    return 32 * 1024 * 1024, 12 * 1024 * 1024      # v7x: 64 MiB physical


def _pick_tile_h(H, W, cin, cp, budget):
    """Largest row-tile TH whose pipelined working set fits `budget` bytes."""
    c9 = 9 * cin

    def need(th):
        rows = th * W
        return (2 * th * (W + 2) * 3 * cin * 2     # input tile, double-buffered, bf16
                + 2 * c9 * cp * 2                  # weights, double-buffered, bf16
                + 2 * rows * cp * 2                # y output, double-buffered, bf16
                + 2 * rows * c9 * 2                # in-kernel slab + slice temporaries
                + 2 * rows * cp * 4                # f32 accumulator + y*y temporary
                + 4 * cp * 4 * 2)                  # per-tile BN partial sums

    best = 1
    for th in range(1, H + 1):
        if need(th) <= budget:
            best = th
    # Prefer an exact divisor of H within 25% of the best tile to avoid tail padding.
    for th in range(best, 0, -1):
        if H % th == 0 and 4 * th >= 3 * best:
            return th
    return best
    # TODO(synk): add a W-tiling fallback for the (rare) case where even TH=1
    # exceeds the VMEM budget (very large W * Cin * Cp).


# --------------------------- Pallas kernels ---------------------------------
def _conv_stats_kernel(x_ref, w_ref, y_ref, sum_ref, sumsq_ref, *, h_valid, tile_h):
    """3x3 conv on one (TH, W) spatial tile as ONE K=9*Cin matmul + partial BN stats.

    x_ref:   (1, TH, W+2, 3*Cin)  bf16, rows pre-stacked over the kh = 0/1/2 shifts
    w_ref:   (9*Cin, Cp)          bf16, rows ordered (kw, kh, cin)
    y_ref:   (1, TH*W, Cp)        bf16 conv output tile (lane-dense, Cp = padded Cout)
    sum_ref / sumsq_ref: (1, 1, Cp)  f32 per-tile partial sums for BatchNorm
    """
    xc = x_ref[0]                                   # (TH, W+2, 3*Cin)
    th, wp2, c3 = xc.shape
    w_out = wp2 - 2

    # Build the (TH*W, 9*Cin) im2col slab once (3 width-shifted views -> lanes)
    # and hit it with a single deep MXU matmul (f32 accumulation).
    slab = jnp.concatenate([xc[:, kw:kw + w_out, :] for kw in range(3)], axis=-1)
    slab = slab.reshape(th * w_out, 3 * c3)
    y = jnp.dot(slab, w_ref[...], preferred_element_type=jnp.float32)   # (R, Cp) f32

    y_ref[0] = y.astype(y_ref.dtype)

    ys = y
    if h_valid is not None:
        # H was padded up to a tile multiple: mask the pad rows out of the stats.
        row = (jax.lax.broadcasted_iota(jnp.int32, (th * w_out, 1), 0) // w_out
               + pl.program_id(1) * tile_h)
        ys = jnp.where(row < h_valid, y, 0.0)

    # Partial BN statistics from the f32 accumulator (finalized outside).
    # TODO(synk): could be moved onto the MXU via ones(1,R) @ y if the XLU/VPU
    # reduction ever shows up as the binding slot.
    sum_ref[0] = jnp.sum(ys, axis=0, keepdims=True)
    sumsq_ref[0] = jnp.sum(ys * ys, axis=0, keepdims=True)


def _bn_relu_kernel(y_ref, scale_ref, shift_ref, o_ref):
    """Lane-dense normalize pass: out = max(y*scale + shift, 0)."""
    y = y_ref[...].astype(jnp.float32)              # (1, R, Cp)
    sc = scale_ref[...].reshape(1, 1, -1)
    sh = shift_ref[...].reshape(1, 1, -1)
    o_ref[...] = jnp.maximum(y * sc + sh, 0.0).astype(o_ref.dtype)


# --------------------------- wrappers ----------------------------------------
def _conv_stats_pass(x_nhwc, w):
    """Conv2d(3x3, pad=1) + per-tile BN partial sums.

    Returns (y, psum, psumsq, meta); y is (T, TH*W, Cp) bf16 in (n, h-tile)-major
    row order, i.e. y.reshape(N, Hp, W, Cp) is the conv output (rows >= H garbage
    when H was padded, sliced off by the caller).
    """
    N, H, W, Cin = x_nhwc.shape
    Cout = w.shape[0]
    Cp = _pad_channels(Cout)
    C9 = 9 * Cin

    vmem_limit, tile_budget = _vmem_budgets()
    TH = _pick_tile_h(H, W, Cin, Cp, tile_budget)
    Hp = _round_up(H, TH)
    nH = Hp // TH
    T = N * nH
    R = TH * W

    # Padded input (conv pad + bottom H-padding), stacked over kh shifts:
    # (N, Hp, W+2, 3*Cin), bf16.  Elementwise producers of x_nhwc (e.g. the previous
    # block's BN+ReLU) fuse into this pad/concat in XLA -- no extra HBM round-trip.
    xp = jnp.pad(x_nhwc, ((0, 0), (1, 1 + Hp - H), (1, 1), (0, 0)))
    xcat = jnp.concatenate([xp[:, 0:Hp], xp[:, 1:Hp + 1], xp[:, 2:Hp + 2]],
                           axis=-1).astype(MATMUL_DTYPE)

    # Weights as a single (9*Cin, Cp) matrix, rows ordered (kw, kh, cin).
    w9 = jnp.transpose(w, (3, 2, 1, 0)).reshape(C9, Cout)
    w9 = jnp.pad(w9, ((0, 0), (0, Cp - Cout))).astype(MATMUL_DTYPE)

    kernel = functools.partial(_conv_stats_kernel,
                               h_valid=(H if Hp != H else None), tile_h=TH)

    y, psum, psumsq = pl.pallas_call(
        kernel,
        grid=(N, nH),
        in_specs=[
            pl.BlockSpec((1, TH, W + 2, 3 * Cin), lambda n, h: (n, h, 0, 0)),
            pl.BlockSpec((C9, Cp), lambda n, h: (0, 0)),
        ],
        out_specs=(
            pl.BlockSpec((1, R, Cp), lambda n, h: (n * nH + h, 0, 0)),
            pl.BlockSpec((1, 1, Cp), lambda n, h: (n * nH + h, 0, 0)),
            pl.BlockSpec((1, 1, Cp), lambda n, h: (n * nH + h, 0, 0)),
        ),
        out_shape=(
            jax.ShapeDtypeStruct((T, R, Cp), MATMUL_DTYPE),
            jax.ShapeDtypeStruct((T, 1, Cp), jnp.float32),
            jax.ShapeDtypeStruct((T, 1, Cp), jnp.float32),
        ),
        compiler_params=pltpu.CompilerParams(
            dimension_semantics=("parallel", "parallel"),
            vmem_limit_bytes=vmem_limit),
        cost_estimate=pl.CostEstimate(
            flops=2 * N * Hp * W * C9 * Cp + 3 * N * Hp * W * Cp,
            transcendentals=0,
            bytes_accessed=(2 * N * Hp * (W + 2) * 3 * Cin + 2 * C9 * Cp
                            + 2 * T * R * Cp + 8 * T * Cp)),
    )(xcat, w9)

    meta = dict(N=N, H=H, Hp=Hp, W=W, Cout=Cout, Cp=Cp, T=T, R=R,
                vmem_limit=vmem_limit)
    return y, psum, psumsq, meta


def _bn_scale_shift(psum, psumsq, gamma, beta, meta):
    """Finalize train-mode BatchNorm statistics (tiny XLA reduction over tiles)."""
    count = jnp.float32(meta["N"] * meta["H"] * meta["W"])   # pad rows masked to 0
    mean = jnp.sum(psum, axis=(0, 1)) / count                # (Cp,)
    ex2 = jnp.sum(psumsq, axis=(0, 1)) / count
    # TODO(synk): E[y^2]-E[y]^2 in f32 can cancel for very large-mean activations;
    # switch to a shifted / Welford-style combine if that regime matters.
    var = jnp.maximum(ex2 - mean * mean, 0.0)
    Cp, Cout = meta["Cp"], meta["Cout"]
    gamma_p = jnp.pad(gamma.astype(jnp.float32), (0, Cp - Cout))
    beta_p = jnp.pad(beta.astype(jnp.float32), (0, Cp - Cout))
    scale = gamma_p * jax.lax.rsqrt(var + EPS)
    shift = beta_p - mean * scale
    return scale, shift


def conv_bn_relu(x_nhwc, w, b, gamma, beta, *, final):
    """One Conv2d(3x3, pad=1) + BatchNorm2d (train-mode batch stats) + ReLU block.

    The conv bias `b` is accepted for interface parity but unused: a per-channel
    constant added before training-mode BN is exactly cancelled by the mean
    subtraction.  For the inner block (final=False) the BN-apply + ReLU is left to
    XLA so it fuses with the next block's pad/concat producer; the final block uses
    the lane-dense Pallas pass.
    """
    del b
    y, psum, psumsq, m = _conv_stats_pass(x_nhwc, w)
    scale, shift = _bn_scale_shift(psum, psumsq, gamma, beta, m)
    N, H, Hp, W = m["N"], m["H"], m["Hp"], m["W"]
    Cout, Cp, T, R = m["Cout"], m["Cp"], m["T"], m["R"]

    if final:
        out = pl.pallas_call(
            _bn_relu_kernel,
            grid=(T,),
            in_specs=[
                pl.BlockSpec((1, R, Cp), lambda t: (t, 0, 0)),
                pl.BlockSpec((1, Cp), lambda t: (0, 0)),
                pl.BlockSpec((1, Cp), lambda t: (0, 0)),
            ],
            out_specs=pl.BlockSpec((1, R, Cp), lambda t: (t, 0, 0)),
            out_shape=jax.ShapeDtypeStruct((T, R, Cp), jnp.float32),
            compiler_params=pltpu.CompilerParams(
                dimension_semantics=("parallel",),
                vmem_limit_bytes=m["vmem_limit"]),
            cost_estimate=pl.CostEstimate(
                flops=3 * T * R * Cp, transcendentals=0,
                bytes_accessed=6 * T * R * Cp),
        )(y, scale.reshape(1, Cp), shift.reshape(1, Cp))
    else:
        # XLA elementwise; fuses into the next block's pad/concat (bf16 materialization).
        out = jnp.maximum(y.astype(jnp.float32) * scale + shift, 0.0)
        out = out.astype(MATMUL_DTYPE)

    # (T, R, Cp) -> (N, Hp, W, Cp) is a pure reshape (row order is n, h, w);
    # drop the H-padding rows and the zero-padded channels.
    return out.reshape(N, Hp, W, Cp)[:, :H, :, :Cout]


def double_conv(x_nchw, params):
    """DoubleConv forward.  x_nchw: (N, Cin, H, W) -> (N, Cout, H, W)."""
    x = jnp.transpose(x_nchw, (0, 2, 3, 1))                  # NCHW -> NHWC
    x = conv_bn_relu(x, params["w1"], params["b1"], params["g1"], params["beta1"],
                     final=False)
    x = conv_bn_relu(x, params["w2"], params["b2"], params["g2"], params["beta2"],
                     final=True)
    return jnp.transpose(x, (0, 3, 1, 2))                    # NHWC -> NCHW


# ---------------- pure-JAX reference (for correctness check) ----------------
def _ref_block(x, w, b, g, beta):
    y = jax.lax.conv_general_dilated(
        x, w, window_strides=(1, 1), padding=((1, 1), (1, 1)),
        dimension_numbers=("NCHW", "OIHW", "NCHW"),
    ) + b[None, :, None, None]
    mean = jnp.mean(y, axis=(0, 2, 3), keepdims=True)
    var = jnp.mean((y - mean) ** 2, axis=(0, 2, 3), keepdims=True)
    y = (y - mean) / jnp.sqrt(var + EPS) * g[None, :, None, None] + beta[None, :, None, None]
    return jnp.maximum(y, 0.0)


def ref_double_conv(x, params):
    y = _ref_block(x, params["w1"], params["b1"], params["g1"], params["beta1"])
    return _ref_block(y, params["w2"], params["b2"], params["g2"], params["beta2"])


if __name__ == "__main__":
    key = jax.random.PRNGKey(0)
    N, Cin, Cout, H, W = 2, 4, 8, 16, 16

    k_x, k_w1, k_b1, k_w2, k_b2 = jax.random.split(key, 5)
    x = jax.random.normal(k_x, (N, Cin, H, W), dtype=jnp.float32)

    params = {
        # Conv weights in PyTorch OIHW layout; biases per output channel.
        "w1": jax.random.normal(k_w1, (Cout, Cin, 3, 3), dtype=jnp.float32) * 0.1,
        "b1": jax.random.normal(k_b1, (Cout,), dtype=jnp.float32) * 0.1,
        "g1": jnp.ones((Cout,), dtype=jnp.float32),      # BN gamma init (PyTorch default)
        "beta1": jnp.zeros((Cout,), dtype=jnp.float32),  # BN beta init
        "w2": jax.random.normal(k_w2, (Cout, Cout, 3, 3), dtype=jnp.float32) * 0.1,
        "b2": jax.random.normal(k_b2, (Cout,), dtype=jnp.float32) * 0.1,
        "g2": jnp.ones((Cout,), dtype=jnp.float32),
        "beta2": jnp.zeros((Cout,), dtype=jnp.float32),
    }

    out = jax.block_until_ready(jax.jit(double_conv)(x, params))
    ref = jax.block_until_ready(ref_double_conv(x, params))

    assert out.shape == (N, Cout, H, W), out.shape
    max_err = float(jnp.max(jnp.abs(out - ref)))
    # bf16 MXU inputs (f32 accumulation) -> loosened tolerance vs. the f32 reference.
    assert jnp.allclose(out, ref, atol=1e-1, rtol=1e-1), max_err

    print("KERNEL_OK")
</pallas_src>

<mosaic_0001>
module attributes {stable_mosaic.version = 11 : i64} {
  func.func @_conv_stats_kernel(%arg0: i32, %arg1: i32, %arg2: memref<1x16x18x12xbf16, #tpu.memory_space<vmem>>, %arg3: memref<36x128xbf16, #tpu.memory_space<vmem>>, %arg4: memref<1x256x128xbf16, #tpu.memory_space<vmem>>, %arg5: memref<1x1x128xf32, #tpu.memory_space<vmem>>, %arg6: memref<1x1x128xf32, #tpu.memory_space<vmem>>) attributes {dimension_semantics = [#tpu.dimension_semantics<parallel>, #tpu.dimension_semantics<parallel>], iteration_bounds = array<i64: 2, 1>, scalar_prefetch = 0 : i64, scratch_operands = 0 : i64, tpu.core_type = #tpu.core_type<tc>, window_params = [{transform_indices = @transform_0, window_bounds = array<i64: 1, 16, 18, 12>}, {pipeline_mode = #tpu.pipeline_mode<synchronous>, transform_indices = @transform_1, window_bounds = array<i64: 36, 128>}, {transform_indices = @transform_2, window_bounds = array<i64: 1, 256, 128>}, {transform_indices = @transform_3, window_bounds = array<i64: 1, 1, 128>}, {transform_indices = @transform_4, window_bounds = array<i64: 1, 1, 128>}]} {
    %c0 = arith.constant 0 : index
    %c0_0 = arith.constant 0 : index
    %c0_1 = arith.constant 0 : index
    %c0_2 = arith.constant 0 : index
    %0 = vector.load %arg2[%c0, %c0_0, %c0_1, %c0_2] : memref<1x16x18x12xbf16, #tpu.memory_space<vmem>>, vector<1x16x18x12xbf16>
    %1 = vector.shape_cast %0 : vector<1x16x18x12xbf16> to vector<16x18x12xbf16>
    %2 = vector.extract_strided_slice %1 {offsets = [0, 0, 0], sizes = [16, 16, 12], strides = [1, 1, 1]} : vector<16x18x12xbf16> to vector<16x16x12xbf16>
    %3 = vector.extract_strided_slice %1 {offsets = [0, 1, 0], sizes = [16, 16, 12], strides = [1, 1, 1]} : vector<16x18x12xbf16> to vector<16x16x12xbf16>
    %4 = vector.extract_strided_slice %1 {offsets = [0, 2, 0], sizes = [16, 16, 12], strides = [1, 1, 1]} : vector<16x18x12xbf16> to vector<16x16x12xbf16>
    %5 = tpu.concatenate %2, %3, %4 in 2 : vector<16x16x12xbf16>, vector<16x16x12xbf16>, vector<16x16x12xbf16> -> vector<16x16x36xbf16>
    %6 = vector.shape_cast %5 : vector<16x16x36xbf16> to vector<256x36xbf16>
    %c0_3 = arith.constant 0 : index
    %c0_4 = arith.constant 0 : index
    %7 = vector.load %arg3[%c0_3, %c0_4] : memref<36x128xbf16, #tpu.memory_space<vmem>>, vector<36x128xbf16>
    %cst = arith.constant dense<0.000000e+00> : vector<256x128xf32>
    %8 = tpu.matmul %6, %7, %cst {dimension_numbers = #tpu.dot_dimension_numbers<[1], [0], [0], [1], [0, 0, 1, 1], [], []>} : vector<256x36xbf16>, vector<36x128xbf16>, vector<256x128xf32> -> vector<256x128xf32>
    %9 = arith.truncf %8 : vector<256x128xf32> to vector<256x128xbf16>
    %c0_5 = arith.constant 0 : index
    %c0_6 = arith.constant 0 : index
    %c0_7 = arith.constant 0 : index
    %10 = vector.load %arg4[%c0_5, %c0_6, %c0_7] : memref<1x256x128xbf16, #tpu.memory_space<vmem>>, vector<1x256x128xbf16>
    %11 = vector.shape_cast %10 : vector<1x256x128xbf16> to vector<256x128xbf16>
    %12 = vector.shape_cast %9 : vector<256x128xbf16> to vector<1x256x128xbf16>
    tpu.vector_store %arg4[%c0_5, %c0_6, %c0_7], %12 {strides = array<i32>} : memref<1x256x128xbf16, #tpu.memory_space<vmem>>, vector<1x256x128xbf16>,
    %cst_8 = arith.constant dense<0.000000e+00> : vector<128xf32>
    %13 = vector.multi_reduction <add>, %8, %cst_8 [0] : vector<256x128xf32> to vector<128xf32>
    %14 = vector.shape_cast %13 : vector<128xf32> to vector<1x128xf32>
    %c0_9 = arith.constant 0 : index
    %c0_10 = arith.constant 0 : index
    %c0_11 = arith.constant 0 : index
    %15 = vector.load %arg5[%c0_9, %c0_10, %c0_11] : memref<1x1x128xf32, #tpu.memory_space<vmem>>, vector<1x1x128xf32>
    %16 = vector.shape_cast %15 : vector<1x1x128xf32> to vector<1x128xf32>
    %17 = vector.shape_cast %14 : vector<1x128xf32> to vector<1x1x128xf32>
    tpu.vector_store %arg5[%c0_9, %c0_10, %c0_11], %17 {strides = array<i32>} : memref<1x1x128xf32, #tpu.memory_space<vmem>>, vector<1x1x128xf32>,
    %18 = arith.mulf %8, %8 : vector<256x128xf32>
    %cst_12 = arith.constant dense<0.000000e+00> : vector<128xf32>
    %19 = vector.multi_reduction <add>, %18, %cst_12 [0] : vector<256x128xf32> to vector<128xf32>
    %20 = vector.shape_cast %19 : vector<128xf32> to vector<1x128xf32>
    %c0_13 = arith.constant 0 : index
    %c0_14 = arith.constant 0 : index
    %c0_15 = arith.constant 0 : index
    %21 = vector.load %arg6[%c0_13, %c0_14, %c0_15] : memref<1x1x128xf32, #tpu.memory_space<vmem>>, vector<1x1x128xf32>
    %22 = vector.shape_cast %21 : vector<1x1x128xf32> to vector<1x128xf32>
    %23 = vector.shape_cast %20 : vector<1x128xf32> to vector<1x1x128xf32>
    tpu.vector_store %arg6[%c0_13, %c0_14, %c0_15], %23 {strides = array<i32>} : memref<1x1x128xf32, #tpu.memory_space<vmem>>, vector<1x1x128xf32>,
    return
  }
  func.func @transform_0(%arg0: i32, %arg1: i32) -> (i32, i32, i32, i32) {
    %c0_i32 = arith.constant 0 : i32
    %c0_i32_0 = arith.constant 0 : i32
    %c0_i32_1 = arith.constant 0 : i32
    return %arg0, %arg1, %c0_i32, %c0_i32_0 : i32, i32, i32, i32
  }
  func.func @transform_1(%arg0: i32, %arg1: i32) -> (i32, i32) {
    %c0_i32 = arith.constant 0 : i32
    %c0_i32_0 = arith.constant 0 : i32
    %c0_i32_1 = arith.constant 0 : i32
    return %c0_i32, %c0_i32_0 : i32, i32
  }
  func.func @transform_2(%arg0: i32, %arg1: i32) -> (i32, i32, i32) {
    %c1_i32 = arith.constant 1 : i32
    %0 = arith.muli %arg0, %c1_i32 : i32
    %1 = arith.addi %0, %arg1 : i32
    %c0_i32 = arith.constant 0 : i32
    %c0_i32_0 = arith.constant 0 : i32
    %c0_i32_1 = arith.constant 0 : i32
    return %1, %c0_i32, %c0_i32_0 : i32, i32, i32
  }
  func.func @transform_3(%arg0: i32, %arg1: i32) -> (i32, i32, i32) {
    %c1_i32 = arith.constant 1 : i32
    %0 = arith.muli %arg0, %c1_i32 : i32
    %1 = arith.addi %0, %arg1 : i32
    %c0_i32 = arith.constant 0 : i32
    %c0_i32_0 = arith.constant 0 : i32
    %c0_i32_1 = arith.constant 0 : i32
    return %1, %c0_i32, %c0_i32_0 : i32, i32, i32
  }
  func.func @transform_4(%arg0: i32, %arg1: i32) -> (i32, i32, i32) {
    %c1_i32 = arith.constant 1 : i32
    %0 = arith.muli %arg0, %c1_i32 : i32
    %1 = arith.addi %0, %arg1 : i32
    %c0_i32 = arith.constant 0 : i32
    %c0_i32_0 = arith.constant 0 : i32
    %c0_i32_1 = arith.constant 0 : i32
    return %1, %c0_i32, %c0_i32_0 : i32, i32, i32
  }
}

module attributes {stable_mosaic.version = 11 : i64} {
  func.func @_bn_relu_kernel(%arg0: i32, %arg1: memref<1x256x128xbf16, #tpu.memory_space<vmem>>, %arg2: memref<1x128xf32, #tpu.memory_space<vmem>>, %arg3: memref<1x128xf32, #tpu.memory_space<vmem>>, %arg4: memref<1x256x128xf32, #tpu.memory_space<vmem>>) attributes {dimension_semantics = [#tpu.dimension_semantics<parallel>], iteration_bounds = array<i64: 2>, scalar_prefetch = 0 : i64, scratch_operands = 0 : i64, tpu.core_type = #tpu.core_type<tc>, window_params = [{transform_indices = @transform_0, window_bounds = array<i64: 1, 256, 128>}, {pipeline_mode = #tpu.pipeline_mode<synchronous>, transform_indices = @transform_1, window_bounds = array<i64: 1, 128>}, {pipeline_mode = #tpu.pipeline_mode<synchronous>, transform_indices = @transform_2, window_bounds = array<i64: 1, 128>}, {transform_indices = @transform_3, window_bounds = array<i64: 1, 256, 128>}]} {
    %c0 = arith.constant 0 : index
    %c0_0 = arith.constant 0 : index
    %c0_1 = arith.constant 0 : index
    %0 = vector.load %arg1[%c0, %c0_0, %c0_1] : memref<1x256x128xbf16, #tpu.memory_space<vmem>>, vector<1x256x128xbf16>
    %1 = arith.extf %0 : vector<1x256x128xbf16> to vector<1x256x128xf32>
    %c0_2 = arith.constant 0 : index
    %c0_3 = arith.constant 0 : index
    %2 = vector.load %arg2[%c0_2, %c0_3] : memref<1x128xf32, #tpu.memory_space<vmem>>, vector<1x128xf32>
    %3 = vector.shape_cast %2 : vector<1x128xf32> to vector<1x1x128xf32>
    %c0_4 = arith.constant 0 : index
    %c0_5 = arith.constant 0 : index
    %4 = vector.load %arg3[%c0_4, %c0_5] : memref<1x128xf32, #tpu.memory_space<vmem>>, vector<1x128xf32>
    %5 = vector.shape_cast %4 : vector<1x128xf32> to vector<1x1x128xf32>
    %6 = vector.broadcast %3 : vector<1x1x128xf32> to vector<1x256x128xf32>
    %7 = arith.mulf %1, %6 : vector<1x256x128xf32>
    %8 = vector.broadcast %5 : vector<1x1x128xf32> to vector<1x256x128xf32>
    %9 = arith.addf %7, %8 : vector<1x256x128xf32>
    %cst = arith.constant 0.000000e+00 : f32
    %10 = vector.broadcast %cst : f32 to vector<1x256x128xf32>
    %11 = arith.maximumf %9, %10 : vector<1x256x128xf32>
    %c0_6 = arith.constant 0 : index
    %c0_7 = arith.constant 0 : index
    %c0_8 = arith.constant 0 : index
    %12 = vector.load %arg4[%c0_6, %c0_7, %c0_8] : memref<1x256x128xf32, #tpu.memory_space<vmem>>, vector<1x256x128xf32>
    tpu.vector_store %arg4[%c0_6, %c0_7, %c0_8], %11 {strides = array<i32>} : memref<1x256x128xf32, #tpu.memory_space<vmem>>, vector<1x256x128xf32>,
    return
  }
  func.func @transform_0(%arg0: i32) -> (i32, i32, i32) {
    %c0_i32 = arith.constant 0 : i32
    %c0_i32_0 = arith.constant 0 : i32
    %c0_i32_1 = arith.constant 0 : i32
    return %arg0, %c0_i32, %c0_i32_0 : i32, i32, i32
  }
  func.func @transform_1(%arg0: i32) -> (i32, i32) {
    %c0_i32 = arith.constant 0 : i32
    %c0_i32_0 = arith.constant 0 : i32
    %c0_i32_1 = arith.constant 0 : i32
    return %c0_i32, %c0_i32_0 : i32, i32
  }
  func.func @transform_2(%arg0: i32) -> (i32, i32) {
    %c0_i32 = arith.constant 0 : i32
    %c0_i32_0 = arith.constant 0 : i32
    %c0_i32_1 = arith.constant 0 : i32
    return %c0_i32, %c0_i32_0 : i32, i32
  }
  func.func @transform_3(%arg0: i32) -> (i32, i32, i32) {
    %c0_i32 = arith.constant 0 : i32
    %c0_i32_0 = arith.constant 0 : i32
    %c0_i32_1 = arith.constant 0 : i32
    return %arg0, %c0_i32, %c0_i32_0 : i32, i32, i32
  }
}

module attributes {stable_mosaic.version = 11 : i64} {
  func.func @_conv_stats_kernel(%arg0: i32, %arg1: i32, %arg2: memref<1x16x18x24xbf16, #tpu.memory_space<vmem>>, %arg3: memref<72x128xbf16, #tpu.memory_space<vmem>>, %arg4: memref<1x256x128xbf16, #tpu.memory_space<vmem>>, %arg5: memref<1x1x128xf32, #tpu.memory_space<vmem>>, %arg6: memref<1x1x128xf32, #tpu.memory_space<vmem>>) attributes {dimension_semantics = [#tpu.dimension_semantics<parallel>, #tpu.dimension_semantics<parallel>], iteration_bounds = array<i64: 2, 1>, scalar_prefetch = 0 : i64, scratch_operands = 0 : i64, tpu.core_type = #tpu.core_type<tc>, window_params = [{transform_indices = @transform_0, window_bounds = array<i64: 1, 16, 18, 24>}, {pipeline_mode = #tpu.pipeline_mode<synchronous>, transform_indices = @transform_1, window_bounds = array<i64: 72, 128>}, {transform_indices = @transform_2, window_bounds = array<i64: 1, 256, 128>}, {transform_indices = @transform_3, window_bounds = array<i64: 1, 1, 128>}, {transform_indices = @transform_4, window_bounds = array<i64: 1, 1, 128>}]} {
    %c0 = arith.constant 0 : index
    %c0_0 = arith.constant 0 : index
    %c0_1 = arith.constant 0 : index
    %c0_2 = arith.constant 0 : index
    %0 = vector.load %arg2[%c0, %c0_0, %c0_1, %c0_2] : memref<1x16x18x24xbf16, #tpu.memory_space<vmem>>, vector<1x16x18x24xbf16>
    %1 = vector.shape_cast %0 : vector<1x16x18x24xbf16> to vector<16x18x24xbf16>
    %2 = vector.extract_strided_slice %1 {offsets = [0, 0, 0], sizes = [16, 16, 24], strides = [1, 1, 1]} : vector<16x18x24xbf16> to vector<16x16x24xbf16>
    %3 = vector.extract_strided_slice %1 {offsets = [0, 1, 0], sizes = [16, 16, 24], strides = [1, 1, 1]} : vector<16x18x24xbf16> to vector<16x16x24xbf16>
    %4 = vector.extract_strided_slice %1 {offsets = [0, 2, 0], sizes = [16, 16, 24], strides = [1, 1, 1]} : vector<16x18x24xbf16> to vector<16x16x24xbf16>
    %5 = tpu.concatenate %2, %3, %4 in 2 : vector<16x16x24xbf16>, vector<16x16x24xbf16>, vector<16x16x24xbf16> -> vector<16x16x72xbf16>
    %6 = vector.shape_cast %5 : vector<16x16x72xbf16> to vector<256x72xbf16>
    %c0_3 = arith.constant 0 : index
    %c0_4 = arith.constant 0 : index
    %7 = vector.load %arg3[%c0_3, %c0_4] : memref<72x128xbf16, #tpu.memory_space<vmem>>, vector<72x128xbf16>
    %cst = arith.constant dense<0.000000e+00> : vector<256x128xf32>
    %8 = tpu.matmul %6, %7, %cst {dimension_numbers = #tpu.dot_dimension_numbers<[1], [0], [0], [1], [0, 0, 1, 1], [], []>} : vector<256x72xbf16>, vector<72x128xbf16>, vector<256x128xf32> -> vector<256x128xf32>
    %9 = arith.truncf %8 : vector<256x128xf32> to vector<256x128xbf16>
    %c0_5 = arith.constant 0 : index
    %c0_6 = arith.constant 0 : index
    %c0_7 = arith.constant 0 : index
    %10 = vector.load %arg4[%c0_5, %c0_6, %c0_7] : memref<1x256x128xbf16, #tpu.memory_space<vmem>>, vector<1x256x128xbf16>
    %11 = vector.shape_cast %10 : vector<1x256x128xbf16> to vector<256x128xbf16>
    %12 = vector.shape_cast %9 : vector<256x128xbf16> to vector<1x256x128xbf16>
    tpu.vector_store %arg4[%c0_5, %c0_6, %c0_7], %12 {strides = array<i32>} : memref<1x256x128xbf16, #tpu.memory_space<vmem>>, vector<1x256x128xbf16>,
    %cst_8 = arith.constant dense<0.000000e+00> : vector<128xf32>
    %13 = vector.multi_reduction <add>, %8, %cst_8 [0] : vector<256x128xf32> to vector<128xf32>
    %14 = vector.shape_cast %13 : vector<128xf32> to vector<1x128xf32>
    %c0_9 = arith.constant 0 : index
    %c0_10 = arith.constant 0 : index
    %c0_11 = arith.constant 0 : index
    %15 = vector.load %arg5[%c0_9, %c0_10, %c0_11] : memref<1x1x128xf32, #tpu.memory_space<vmem>>, vector<1x1x128xf32>
    %16 = vector.shape_cast %15 : vector<1x1x128xf32> to vector<1x128xf32>
    %17 = vector.shape_cast %14 : vector<1x128xf32> to vector<1x1x128xf32>
    tpu.vector_store %arg5[%c0_9, %c0_10, %c0_11], %17 {strides = array<i32>} : memref<1x1x128xf32, #tpu.memory_space<vmem>>, vector<1x1x128xf32>,
    %18 = arith.mulf %8, %8 : vector<256x128xf32>
    %cst_12 = arith.constant dense<0.000000e+00> : vector<128xf32>
    %19 = vector.multi_reduction <add>, %18, %cst_12 [0] : vector<256x128xf32> to vector<128xf32>
    %20 = vector.shape_cast %19 : vector<128xf32> to vector<1x128xf32>
    %c0_13 = arith.constant 0 : index
    %c0_14 = arith.constant 0 : index
    %c0_15 = arith.constant 0 : index
    %21 = vector.load %arg6[%c0_13, %c0_14, %c0_15] : memref<1x1x128xf32, #tpu.memory_space<vmem>>, vector<1x1x128xf32>
    %22 = vector.shape_cast %21 : vector<1x1x128xf32> to vector<1x128xf32>
    %23 = vector.shape_cast %20 : vector<1x128xf32> to vector<1x1x128xf32>
    tpu.vector_store %arg6[%c0_13, %c0_14, %c0_15], %23 {strides = array<i32>} : memref<1x1x128xf32, #tpu.memory_space<vmem>>, vector<1x1x128xf32>,
    return
  }
  func.func @transform_0(%arg0: i32, %arg1: i32) -> (i32, i32, i32, i32) {
    %c0_i32 = arith.constant 0 : i32
    %c0_i32_0 = arith.constant 0 : i32
    %c0_i32_1 = arith.constant 0 : i32
    return %arg0, %arg1, %c0_i32, %c0_i32_0 : i32, i32, i32, i32
  }
  func.func @transform_1(%arg0: i32, %arg1: i32) -> (i32, i32) {
    %c0_i32 = arith.constant 0 : i32
    %c0_i32_0 = arith.constant 0 : i32
    %c0_i32_1 = arith.constant 0 : i32
    return %c0_i32, %c0_i32_0 : i32, i32
  }
  func.func @transform_2(%arg0: i32, %arg1: i32) -> (i32, i32, i32) {
    %c1_i32 = arith.constant 1 : i32
    %0 = arith.muli %arg0, %c1_i32 : i32
    %1 = arith.addi %0, %arg1 : i32
    %c0_i32 = arith.constant 0 : i32
    %c0_i32_0 = arith.constant 0 : i32
    %c0_i32_1 = arith.constant 0 : i32
    return %1, %c0_i32, %c0_i32_0 : i32, i32, i32
  }
  func.func @transform_3(%arg0: i32, %arg1: i32) -> (i32, i32, i32) {
    %c1_i32 = arith.constant 1 : i32
    %0 = arith.muli %arg0, %c1_i32 : i32
    %1 = arith.addi %0, %arg1 : i32
    %c0_i32 = arith.constant 0 : i32
    %c0_i32_0 = arith.constant 0 : i32
    %c0_i32_1 = arith.constant 0 : i32
    return %1, %c0_i32, %c0_i32_0 : i32, i32, i32
  }
  func.func @transform_4(%arg0: i32, %arg1: i32) -> (i32, i32, i32) {
    %c1_i32 = arith.constant 1 : i32
    %0 = arith.muli %arg0, %c1_i32 : i32
    %1 = arith.addi %0, %arg1 : i32
    %c0_i32 = arith.constant 0 : i32
    %c0_i32_0 = arith.constant 0 : i32
    %c0_i32_1 = arith.constant 0 : i32
    return %1, %c0_i32, %c0_i32_0 : i32, i32, i32
  }
}

</mosaic_0001>

<llo_original>
// kernel: double_conv.3
$region0: #{double_conv.3}
  #allocation0 [shape = 'u32[]', space=smem, size = 0x4, offset = 0x4, fixed_abs, tag = 'smem constant byte address 0x4 - core index']
  #allocation1 [shape = 'u32[144,128]{1,0:T(1,128)}', space=vmem, size = 0x12000, scoped, tag = 'internal scratch']
  %s0 = inlined_call_operand.vmem [shape: bf16[2,16,18,12], index: 0, kind: input, shape index: {}]
  %s1 = inlined_call_operand.vmem [shape: bf16[36,128], index: 1, kind: input, shape index: {}]
  %s2 = inlined_call_operand.vmem [shape: bf16[2,256,128], index: 2, kind: output, shape index: {0}]
  %s3 = inlined_call_operand.vmem [shape: f32[2,1,128], index: 3, kind: output, shape index: {1}]
  %s4 = inlined_call_operand.vmem [shape: f32[2,1,128], index: 4, kind: output, shape index: {2}]
  %5 = xla_tuple %s2, %s3, %s4
  %s6 = sld [smem:[#allocation0]]
  $region57: #{double_conv.3} parent=0
    _
  %s8 = ssub.s32 1, %s6
  %s9 = scalar_select 0, %s8, %s6
  loop: start=0, step=1, limit=4
  $region2: #{double_conv.3} parent=0 // loop_pre_header
    _
  $region3: #{double_conv.3} parent=0 // loop_header
    %s11 = sphi 0, %s15
    %p12 = scmp.ge.s32.totalorder %s11, 4
    %s18 = sphi 0, %s30
    %s19 = sphi 0, %s26
    %s20 = sphi 0, %s18
    %s21 = sphi 0, %s19
    %s22 = sphi 0, %s20
    %s23 = sphi 0, %s21
    %s35 = sphi 0, %s37
    %s38 = sphi 0, %s35
    %s39 = sphi 0, %s38
    %s55 = sphi 0, %s39
    %s59 = sphi 0, %s59
    %s61 = sphi 0, %s59
    %s62 = sphi 0, %s61
    %s76 = sphi 0, %s62
    %s84 = sphi 0, %s86
    %s87 = sphi 0, %s84
    %s88 = sphi 0, %s87
    %s104 = sphi 0, %s88
    %s112 = sphi 0, %s114
    %s115 = sphi 0, %s112
    %s116 = sphi 0, %s115
    %s132 = sphi 0, %s116
    %s140 = sphi 0, %s142
    %s143 = sphi 0, %s140
    %s144 = sphi 0, %s143
    %s160 = sphi 0, %s144
  $region4: #{double_conv.3} parent=0 // loop_header_branch
    %14 = sbr.rel (%p12) target = $region8
  $region5: #{double_conv.3} parent=0 // loop_body
    %s16 = ssub.s32 %s11, 1
    %s17 = ssub.s32 %s11, 2
    %s24 = sadd.s32 1, %s19
    %p25 = scmp.ge.s32.totalorder %s24, 1
    %s26 = scalar_select %p25, 0, %s24
    %s27 = sadd.s32 1, %s18
    %s28 = scalar_select %p25, %s27, %s18
    %p29 = scmp.ge.s32.totalorder %s28, 2
    %s30 = scalar_select %p29, 0, %s28
    %s31 = ssub.s32 %s18, %s30
    %s32 = ssub.s32 %s19, %s26
    %s33 = sor.u32 %s31, %s32
    %p34 = scmp.eq.s32.totalorder %s33, 0
    %s36 = sadd.s32 %s35, 1
    %s37 = scalar_select %p34, %s35, %s36
    %p40 = pneg %p34
    %p41 = scmp.eq.s32.totalorder %s11, 1
    %p42 = por %p40, %p41
    %p43 = scmp.ne.s32.totalorder %s35, %s38
    %p44 = scmp.eq.s32.totalorder %s11, 0
    %p45 = por %p43, %p44
    %p46 = scmp.ne.s32.totalorder %s35, %s38
    %p47 = scmp.eq.s32.totalorder %s16, 1
    %p48 = por %p46, %p47
    %p49 = scmp.ne.s32.totalorder %s38, %s39
    %p50 = scmp.eq.s32.totalorder %s16, 0
    %p51 = por %p49, %p50
    %p52 = scmp.ne.s32.totalorder %s38, %s39
    %p53 = scmp.eq.s32.totalorder %s17, 1
    %p54 = por %p52, %p53
    %p56 = scmp.ne.s32.totalorder %s39, %s55
    %p57 = scmp.eq.s32.totalorder %s17, 0
    %p58 = por %p56, %p57
    %s60 = sadd.s32 %s59, 1
    %p63 = scmp.eq.s32.totalorder %s11, 1
    %p64 = scmp.ne.s32.totalorder %s59, %s61
    %p65 = scmp.eq.s32.totalorder %s11, 0
    %p66 = por %p64, %p65
    %p67 = scmp.ne.s32.totalorder %s59, %s61
    %p68 = scmp.eq.s32.totalorder %s16, 1
    %p69 = por %p67, %p68
    %p70 = scmp.ne.s32.totalorder %s61, %s62
    %p71 = scmp.eq.s32.totalorder %s16, 0
    %p72 = por %p70, %p71
    %p73 = scmp.ne.s32.totalorder %s61, %s62
    %p74 = scmp.eq.s32.totalorder %s17, 1
    %p75 = por %p73, %p74
    %p77 = scmp.ne.s32.totalorder %s62, %s76
    %p78 = scmp.eq.s32.totalorder %s17, 0
    %p79 = por %p77, %p78
    %s80 = sadd.s32 %s18, %s19
    %s81 = sadd.s32 %s30, %s26
    %s82 = ssub.s32 %s80, %s81
    %p83 = scmp.eq.s32.totalorder %s82, 0
    %s85 = sadd.s32 %s84, 1
    %s86 = scalar_select %p83, %s84, %s85
    %p89 = pneg %p83
    %p90 = scmp.eq.s32.totalorder %s11, 1
    %p91 = por %p89, %p90
    %p92 = scmp.ne.s32.totalorder %s84, %s87
    %p93 = scmp.eq.s32.totalorder %s11, 0
    %p94 = por %p92, %p93
    %p95 = scmp.ne.s32.totalorder %s84, %s87
    %p96 = scmp.eq.s32.totalorder %s16, 1
    %p97 = por %p95, %p96
    %p98 = scmp.ne.s32.totalorder %s87, %s88
    %p99 = scmp.eq.s32.totalorder %s16, 0
    %p100 = por %p98, %p99
    %p101 = scmp.ne.s32.totalorder %s87, %s88
    %p102 = scmp.eq.s32.totalorder %s17, 1
    %p103 = por %p101, %p102
    %p105 = scmp.ne.s32.totalorder %s88, %s104
    %p106 = scmp.eq.s32.totalorder %s17, 0
    %p107 = por %p105, %p106
    %s108 = sadd.s32 %s18, %s19
    %s109 = sadd.s32 %s30, %s26
    %s110 = ssub.s32 %s108, %s109
    %p111 = scmp.eq.s32.totalorder %s110, 0
    %s113 = sadd.s32 %s112, 1
    %s114 = scalar_select %p111, %s112, %s113
    %p117 = pneg %p111
    %p118 = scmp.eq.s32.totalorder %s11, 1
    %p119 = por %p117, %p118
    %p120 = scmp.ne.s32.totalorder %s112, %s115
    %p121 = scmp.eq.s32.totalorder %s11, 0
    %p122 = por %p120, %p121
    %p123 = scmp.ne.s32.totalorder %s112, %s115
    %p124 = scmp.eq.s32.totalorder %s16, 1
    %p125 = por %p123, %p124
    %p126 = scmp.ne.s32.totalorder %s115, %s116
    %p127 = scmp.eq.s32.totalorder %s16, 0
    %p128 = por %p126, %p127
    %p129 = scmp.ne.s32.totalorder %s115, %s116
    %p130 = scmp.eq.s32.totalorder %s17, 1
    %p131 = por %p129, %p130
    %p133 = scmp.ne.s32.totalorder %s116, %s132
    %p134 = scmp.eq.s32.totalorder %s17, 0
    %p135 = por %p133, %p134
    %s136 = sadd.s32 %s18, %s19
    %s137 = sadd.s32 %s30, %s26
    %s138 = ssub.s32 %s136, %s137
    %p139 = scmp.eq.s32.totalorder %s138, 0
    %s141 = sadd.s32 %s140, 1
    %s142 = scalar_select %p139, %s140, %s141
    %p145 = pneg %p139
    %p146 = scmp.eq.s32.totalorder %s11, 1
    %p147 = por %p145, %p146
    %p148 = scmp.ne.s32.totalorder %s140, %s143
    %p149 = scmp.eq.s32.totalorder %s11, 0
    %p150 = por %p148, %p149
    %p151 = scmp.ne.s32.totalorder %s140, %s143
    %p152 = scmp.eq.s32.totalorder %s16, 1
    %p153 = por %p151, %p152
    %p154 = scmp.ne.s32.totalorder %s143, %s144
    %p155 = scmp.eq.s32.totalorder %s16, 0
    %p156 = por %p154, %p155
    %p157 = scmp.ne.s32.totalorder %s143, %s144
    %p158 = scmp.eq.s32.totalorder %s17, 1
    %p159 = por %p157, %p158
    %p161 = scmp.ne.s32.totalorder %s144, %s160
    %p162 = scmp.eq.s32.totalorder %s17, 0
    %p163 = por %p161, %p162
    %p164 = scmp.le.s32.totalorder 1, %s11
    %p165 = scmp.lt.s32.totalorder %s11, 3
    %p166 = pnand %p164, %p165
    %p167 = pneg %p166
    // Predicated region
    $region9: #{double_conv.3} parent=5 // pred_check
      _
    $region10: #{double_conv.3} parent=5 // pred_check_branch
      %169 = sbr.rel (%p166) target = $region12
    $region11: #{double_conv.3} parent=5 // pred_region
      %s170 = ssub.s32 %s11, 1
      // Predicated region
      $region13: #{double_conv.3} parent=11 // pred_check
        %p171 = pneg %p72
      $region14: #{double_conv.3} parent=11 // pred_check_branch
        %173 = sbr.rel (%p171) target = $region16
      $region15: #{double_conv.3} parent=11 // pred_region
        _
      $region16: #{double_conv.3} parent=11 // pred_fallthru
        _
    $region12: #{double_conv.3} parent=5 // pred_fallthru
      _
    %p174 = scmp.lt.s32.totalorder %s11, 2
    // Predicated region
    $region17: #{double_conv.3} parent=5 // pred_check
      %p175 = pneg %p174
    $region18: #{double_conv.3} parent=5 // pred_check_branch
      %177 = sbr.rel (%p175) target = $region20
    $region19: #{double_conv.3} parent=5 // pred_region
      // Predicated region
      $region21: #{double_conv.3} parent=19 // pred_check
        %p178 = pneg %p45
      $region22: #{double_conv.3} parent=19 // pred_check_branch
        %180 = sbr.rel (%p178) target = $region24
      $region23: #{double_conv.3} parent=19 // pred_region
        %s181 = smul.u32 16, %s19
        %p182 = scmp.lt.s32.totalorder %s18, 1
        %s183 = scalar_select %p182, %s18, 1
        %p184 = scmp.lt.s32.totalorder %s181, 15
        %s185 = scalar_select %p184, %s181, 15
        %s186 = smul.addr %s185, 3
        %s187 = smul.addr %s183, 48
        %s188 = sadd.s32 %s186, %s187
        %s189 = smul.addr %s188, 4
        %s190 = scalar_lea.vmem %s0, %s189
        %s191 = smul.u32 16, %s19
      $region24: #{double_conv.3} parent=19 // pred_fallthru
        _
    $region20: #{double_conv.3} parent=5 // pred_fallthru
      _
    %p192 = scmp.le.s32.totalorder 1, %s11
    %p193 = scmp.lt.s32.totalorder %s11, 3
    %p194 = pnand %p192, %p193
    %p195 = pneg %p194
    // Predicated region
    $region25: #{double_conv.3} parent=5 // pred_check
      _
    $region26: #{double_conv.3} parent=5 // pred_check_branch
      %197 = sbr.rel (%p194) target = $region28
    $region27: #{double_conv.3} parent=5 // pred_region
      %s198 = ssub.s32 %s11, 1
      %s199 = smul.u32 16, %s21
      %p200 = scmp.lt.s32.totalorder %s20, 1
      %s201 = scalar_select %p200, %s20, 1
      %p202 = scmp.lt.s32.totalorder %s199, 15
      %s203 = scalar_select %p202, %s199, 15
      %s204 = smul.addr %s203, 3
      %s205 = smul.addr %s201, 48
      %s206 = sadd.s32 %s204, %s205
      %s207 = smul.addr %s206, 4
      %s208 = scalar_lea.vmem %s0, %s207
      %p209 = pneg %p51
      %p210 = pneg %p48
      %p211 = pneg %p72
      %p212 = pneg %p69
      %p213 = pneg %p100
      %p214 = pneg %p97
      %s215 = sadd.s32 %s20, %s21
      %p216 = scmp.lt.s32.totalorder %s215, 1
      %s217 = scalar_select %p216, %s215, 1
      %s218 = smul.addr %s217, 32
      %s219 = smul.addr %s218, 4
      %s220 = scalar_lea.vmem %s2, %s219
      %p221 = pneg %p128
      %p222 = pneg %p125
      %s223 = sadd.s32 %s20, %s21
      %p224 = scmp.lt.s32.totalorder %s223, 1
      %s225 = scalar_select %p224, %s223, 1
      %s226 = scalar_lea.vmem %s3, %s225
      %p227 = pneg %p156
      %p228 = pneg %p153
      %s229 = sadd.s32 %s20, %s21
      %p230 = scmp.lt.s32.totalorder %s229, 1
      %s231 = scalar_select %p230, %s229, 1
      %s232 = scalar_lea.vmem %s4, %s231
      %s233 = smul.u32 16, %s21
      %p234 = scmp.lt.s32.totalorder %s20, 1
      %s235 = scalar_select %p234, %s20, 1
      %p236 = scmp.lt.s32.totalorder %s233, 15
      %s237 = scalar_select %p236, %s233, 15
      %s238 = smul.addr %s237, 3
      %s239 = smul.addr %s235, 48
      %s240 = sadd.s32 %s238, %s239
      %s241 = smul.addr %s240, 4
      %s242 = scalar_lea.vmem %s0, %s241
      %s243 = smul.u32 16, %s21
      %s244 = sadd.s32 %s20, %s21
      %p245 = scmp.lt.s32.totalorder %s244, 1
      %s246 = scalar_select %p245, %s244, 1
      %s247 = smul.addr %s246, 32
      %s248 = smul.addr %s247, 4
      %s249 = scalar_lea.vmem %s2, %s248
      %s250 = sadd.s32 %s20, %s21
      %s251 = sadd.s32 %s20, %s21
      %p252 = scmp.lt.s32.totalorder %s251, 1
      %s253 = scalar_select %p252, %s251, 1
      %s254 = scalar_lea.vmem %s3, %s253
      %s255 = sadd.s32 %s20, %s21
      %s256 = sadd.s32 %s20, %s21
      %p257 = scmp.lt.s32.totalorder %s256, 1
      %s258 = scalar_select %p257, %s256, 1
      %s259 = scalar_lea.vmem %s4, %s258
      %s260 = sadd.s32 %s20, %s21
      %v262 = vld [vmem:[%s242] sm:$0xf]
      %v263 = vld [vmem:[%s242 + $0x4] sm:$0xf]
      %v264 = vld [vmem:[%s242 + $0x8] sm:$0x1]
      %v265 = vld [vmem:[%s242 + $0xc] sm:$0xf]
      %v266 = vld [vmem:[%s242 + $0x10] sm:$0xf]
      %v267 = vld [vmem:[%s242 + $0x14] sm:$0x1]
      %v268 = vld [vmem:[%s242 + $0x18] sm:$0xf]
      %v269 = vld [vmem:[%s242 + $0x1c] sm:$0xf]
      %v270 = vld [vmem:[%s242 + $0x20] sm:$0x1]
      %v271 = vld [vmem:[%s242 + $0x24] sm:$0xf]
      %v272 = vld [vmem:[%s242 + $0x28] sm:$0xf]
      %v273 = vld [vmem:[%s242 + $0x2c] sm:$0x1]
      %v274 = vld [vmem:[%s242 + $0x30] sm:$0xf]
      %v275 = vld [vmem:[%s242 + $0x34] sm:$0xf]
      %v276 = vld [vmem:[%s242 + $0x38] sm:$0x1]
      %v277 = vld [vmem:[%s242 + $0x3c] sm:$0xf]
      %v278 = vld [vmem:[%s242 + $0x40] sm:$0xf]
      %v279 = vld [vmem:[%s242 + $0x44] sm:$0x1]
      %v280 = vld [vmem:[%s242 + $0x48] sm:$0xf]
      %v281 = vld [vmem:[%s242 + $0x4c] sm:$0xf]
      %v282 = vld [vmem:[%s242 + $0x50] sm:$0x1]
      %v283 = vld [vmem:[%s242 + $0x54] sm:$0xf]
      %v284 = vld [vmem:[%s242 + $0x58] sm:$0xf]
      %v285 = vld [vmem:[%s242 + $0x5c] sm:$0x1]
      %v286 = vld [vmem:[%s242 + $0x60] sm:$0xf]
      %v287 = vld [vmem:[%s242 + $0x64] sm:$0xf]
      %v288 = vld [vmem:[%s242 + $0x68] sm:$0x1]
      %v289 = vld [vmem:[%s242 + $0x6c] sm:$0xf]
      %v290 = vld [vmem:[%s242 + $0x70] sm:$0xf]
      %v291 = vld [vmem:[%s242 + $0x74] sm:$0x1]
      %v292 = vld [vmem:[%s242 + $0x78] sm:$0xf]
      %v293 = vld [vmem:[%s242 + $0x7c] sm:$0xf]
      %v294 = vld [vmem:[%s242 + $0x80] sm:$0x1]
      %v295 = vld [vmem:[%s242 + $0x84] sm:$0xf]
      %v296 = vld [vmem:[%s242 + $0x88] sm:$0xf]
      %v297 = vld [vmem:[%s242 + $0x8c] sm:$0x1]
      %v298 = vld [vmem:[%s242 + $0x90] sm:$0xf]
      %v299 = vld [vmem:[%s242 + $0x94] sm:$0xf]
      %v300 = vld [vmem:[%s242 + $0x98] sm:$0x1]
      %v301 = vld [vmem:[%s242 + $0x9c] sm:$0xf]
      %v302 = vld [vmem:[%s242 + $0xa0] sm:$0xf]
      %v303 = vld [vmem:[%s242 + $0xa4] sm:$0x1]
      %v304 = vld [vmem:[%s242 + $0xa8] sm:$0xf]
      %v305 = vld [vmem:[%s242 + $0xac] sm:$0xf]
      %v306 = vld [vmem:[%s242 + $0xb0] sm:$0x1]
      %v307 = vld [vmem:[%s242 + $0xb4] sm:$0xf]
      %v308 = vld [vmem:[%s242 + $0xb8] sm:$0xf]
      %v309 = vld [vmem:[%s242 + $0xbc] sm:$0x1]
      %v342 = vunpack.c.l.b16 %v262
      %v343 = vunpack.c.l.b16 %v263
      %v344 = vunpack.c.l.b16 %v265
      %v345 = vunpack.c.l.b16 %v266
      %v346 = vunpack.c.l.b16 %v268
      %v347 = vunpack.c.l.b16 %v269
      %v348 = vunpack.c.l.b16 %v271
      %v349 = vunpack.c.l.b16 %v272
      %v350 = vunpack.c.l.b16 %v274
      %v351 = vunpack.c.l.b16 %v275
      %v352 = vunpack.c.l.b16 %v277
      %v353 = vunpack.c.l.b16 %v278
      %v354 = vunpack.c.l.b16 %v280
      %v355 = vunpack.c.l.b16 %v281
      %v356 = vunpack.c.l.b16 %v283
      %v357 = vunpack.c.l.b16 %v284
      %v358 = vunpack.c.l.b16 %v286
      %v359 = vunpack.c.l.b16 %v287
      %v360 = vunpack.c.l.b16 %v289
      %v361 = vunpack.c.l.b16 %v290
      %v362 = vunpack.c.l.b16 %v292
      %v363 = vunpack.c.l.b16 %v293
      %v364 = vunpack.c.l.b16 %v295
      %v365 = vunpack.c.l.b16 %v296
      %v366 = vunpack.c.l.b16 %v298
      %v367 = vunpack.c.l.b16 %v299
      %v368 = vunpack.c.l.b16 %v301
      %v369 = vunpack.c.l.b16 %v302
      %v370 = vunpack.c.l.b16 %v304
      %v371 = vunpack.c.l.b16 %v305
      %v372 = vunpack.c.l.b16 %v307
      %v373 = vunpack.c.l.b16 %v308
      %v374 = vpack.c.b16 %v343, %v342
      %v375 = vpack.c.b16 %v345, %v344
      %v376 = vpack.c.b16 %v347, %v346
      %v377 = vpack.c.b16 %v349, %v348
      %v378 = vpack.c.b16 %v351, %v350
      %v379 = vpack.c.b16 %v353, %v352
      %v380 = vpack.c.b16 %v355, %v354
      %v381 = vpack.c.b16 %v357, %v356
      %v382 = vpack.c.b16 %v359, %v358
      %v383 = vpack.c.b16 %v361, %v360
      %v384 = vpack.c.b16 %v363, %v362
      %v385 = vpack.c.b16 %v365, %v364
      %v386 = vpack.c.b16 %v367, %v366
      %v387 = vpack.c.b16 %v369, %v368
      %v388 = vpack.c.b16 %v371, %v370
      %v389 = vpack.c.b16 %v373, %v372
      %v406 = vunpack.c.l.b16 %v264
      %v407 = vunpack.c.l.b16 %v267
      %v408 = vunpack.c.l.b16 %v270
      %v409 = vunpack.c.l.b16 %v273
      %v410 = vunpack.c.l.b16 %v276
      %v411 = vunpack.c.l.b16 %v279
      %v412 = vunpack.c.l.b16 %v282
      %v413 = vunpack.c.l.b16 %v285
      %v414 = vunpack.c.l.b16 %v288
      %v415 = vunpack.c.l.b16 %v291
      %v416 = vunpack.c.l.b16 %v294
      %v417 = vunpack.c.l.b16 %v297
      %v418 = vunpack.c.l.b16 %v300
      %v419 = vunpack.c.l.b16 %v303
      %v420 = vunpack.c.l.b16 %v306
      %v421 = vunpack.c.l.b16 %v309
      %v422 = vpack.c.b16 %v406, %v406
      %v423 = vpack.c.b16 %v407, %v407
      %v424 = vpack.c.b16 %v408, %v408
      %v425 = vpack.c.b16 %v409, %v409
      %v426 = vpack.c.b16 %v410, %v410
      %v427 = vpack.c.b16 %v411, %v411
      %v428 = vpack.c.b16 %v412, %v412
      %v429 = vpack.c.b16 %v413, %v413
      %v430 = vpack.c.b16 %v414, %v414
      %v431 = vpack.c.b16 %v415, %v415
      %v432 = vpack.c.b16 %v416, %v416
      %v433 = vpack.c.b16 %v417, %v417
      %v434 = vpack.c.b16 %v418, %v418
      %v435 = vpack.c.b16 %v419, %v419
      %v436 = vpack.c.b16 %v420, %v420
      %v437 = vpack.c.b16 %v421, %v421
      %vm438 = vsmask.f32 7424
      %v440 = vshrl.u32 %v374, 16
      %v442 = vshll.u32 %v374, 16
      %v444 = vrot.slane %v442, 1
      %v445 = vor.u32 %v440, %v444
      %v447 = vshll.u32 %v422, 16
      %v449 = vrot.slane %v447, 1
      %v450 = vsel %vm438, %v445, %v449
      %v452 = vshrl.u32 %v375, 16
      %v454 = vshll.u32 %v375, 16
      %v456 = vrot.slane %v454, 1
      %v457 = vor.u32 %v452, %v456
      %v459 = vshll.u32 %v423, 16
      %v461 = vrot.slane %v459, 1
      %v462 = vsel %vm438, %v457, %v461
      %v464 = vshrl.u32 %v376, 16
      %v466 = vshll.u32 %v376, 16
      %v468 = vrot.slane %v466, 1
      %v469 = vor.u32 %v464, %v468
      %v471 = vshll.u32 %v424, 16
      %v473 = vrot.slane %v471, 1
      %v474 = vsel %vm438, %v469, %v473
      %v476 = vshrl.u32 %v377, 16
      %v478 = vshll.u32 %v377, 16
      %v480 = vrot.slane %v478, 1
      %v481 = vor.u32 %v476, %v480
      %v483 = vshll.u32 %v425, 16
      %v485 = vrot.slane %v483, 1
      %v486 = vsel %vm438, %v481, %v485
      %v488 = vshrl.u32 %v378, 16
      %v490 = vshll.u32 %v378, 16
      %v492 = vrot.slane %v490, 1
      %v493 = vor.u32 %v488, %v492
      %v495 = vshll.u32 %v426, 16
      %v497 = vrot.slane %v495, 1
      %v498 = vsel %vm438, %v493, %v497
      %v500 = vshrl.u32 %v379, 16
      %v502 = vshll.u32 %v379, 16
      %v504 = vrot.slane %v502, 1
      %v505 = vor.u32 %v500, %v504
      %v507 = vshll.u32 %v427, 16
      %v509 = vrot.slane %v507, 1
      %v510 = vsel %vm438, %v505, %v509
      %v512 = vshrl.u32 %v380, 16
      %v514 = vshll.u32 %v380, 16
      %v516 = vrot.slane %v514, 1
      %v517 = vor.u32 %v512, %v516
      %v519 = vshll.u32 %v428, 16
      %v521 = vrot.slane %v519, 1
      %v522 = vsel %vm438, %v517, %v521
      %v524 = vshrl.u32 %v381, 16
      %v526 = vshll.u32 %v381, 16
      %v528 = vrot.slane %v526, 1
      %v529 = vor.u32 %v524, %v528
      %v531 = vshll.u32 %v429, 16
      %v533 = vrot.slane %v531, 1
      %v534 = vsel %vm438, %v529, %v533
      %v536 = vshrl.u32 %v382, 16
      %v538 = vshll.u32 %v382, 16
      %v540 = vrot.slane %v538, 1
      %v541 = vor.u32 %v536, %v540
      %v543 = vshll.u32 %v430, 16
      %v545 = vrot.slane %v543, 1
      %v546 = vsel %vm438, %v541, %v545
      %v548 = vshrl.u32 %v383, 16
      %v550 = vshll.u32 %v383, 16
      %v552 = vrot.slane %v550, 1
      %v553 = vor.u32 %v548, %v552
      %v555 = vshll.u32 %v431, 16
      %v557 = vrot.slane %v555, 1
      %v558 = vsel %vm438, %v553, %v557
      %v560 = vshrl.u32 %v384, 16
      %v562 = vshll.u32 %v384, 16
      %v564 = vrot.slane %v562, 1
      %v565 = vor.u32 %v560, %v564
      %v567 = vshll.u32 %v432, 16
      %v569 = vrot.slane %v567, 1
      %v570 = vsel %vm438, %v565, %v569
      %v572 = vshrl.u32 %v385, 16
      %v574 = vshll.u32 %v385, 16
      %v576 = vrot.slane %v574, 1
      %v577 = vor.u32 %v572, %v576
      %v579 = vshll.u32 %v433, 16
      %v581 = vrot.slane %v579, 1
      %v582 = vsel %vm438, %v577, %v581
      %v584 = vshrl.u32 %v386, 16
      %v586 = vshll.u32 %v386, 16
      %v588 = vrot.slane %v586, 1
      %v589 = vor.u32 %v584, %v588
      %v591 = vshll.u32 %v434, 16
      %v593 = vrot.slane %v591, 1
      %v594 = vsel %vm438, %v589, %v593
      %v596 = vshrl.u32 %v387, 16
      %v598 = vshll.u32 %v387, 16
      %v600 = vrot.slane %v598, 1
      %v601 = vor.u32 %v596, %v600
      %v603 = vshll.u32 %v435, 16
      %v605 = vrot.slane %v603, 1
      %v606 = vsel %vm438, %v601, %v605
      %v608 = vshrl.u32 %v388, 16
      %v610 = vshll.u32 %v388, 16
      %v612 = vrot.slane %v610, 1
      %v613 = vor.u32 %v608, %v612
      %v615 = vshll.u32 %v436, 16
      %v617 = vrot.slane %v615, 1
      %v618 = vsel %vm438, %v613, %v617
      %v620 = vshrl.u32 %v389, 16
      %v622 = vshll.u32 %v389, 16
      %v624 = vrot.slane %v622, 1
      %v625 = vor.u32 %v620, %v624
      %v627 = vshll.u32 %v437, 16
      %v629 = vrot.slane %v627, 1
      %v630 = vsel %vm438, %v625, %v629
      %631 = vrot.lane.b32.xlu0 %v450, 12
      %v632 = vpop.permute.xlu0 %631
      %633 = vrot.lane.b32.xlu0 %v462, 12
      %v634 = vpop.permute.xlu0 %633
      %635 = vrot.lane.b32.xlu0 %v474, 12
      %v636 = vpop.permute.xlu0 %635
      %637 = vrot.lane.b32.xlu0 %v486, 12
      %v638 = vpop.permute.xlu0 %637
      %639 = vrot.lane.b32.xlu0 %v498, 12
      %v640 = vpop.permute.xlu0 %639
      %641 = vrot.lane.b32.xlu0 %v510, 12
      %v642 = vpop.permute.xlu0 %641
      %643 = vrot.lane.b32.xlu0 %v522, 12
      %v644 = vpop.permute.xlu0 %643
      %645 = vrot.lane.b32.xlu0 %v534, 12
      %v646 = vpop.permute.xlu0 %645
      %647 = vrot.lane.b32.xlu0 %v546, 12
      %v648 = vpop.permute.xlu0 %647
      %649 = vrot.lane.b32.xlu0 %v558, 12
      %v650 = vpop.permute.xlu0 %649
      %651 = vrot.lane.b32.xlu0 %v570, 12
      %v652 = vpop.permute.xlu0 %651
      %653 = vrot.lane.b32.xlu0 %v582, 12
      %v654 = vpop.permute.xlu0 %653
      %655 = vrot.lane.b32.xlu0 %v594, 12
      %v656 = vpop.permute.xlu0 %655
      %657 = vrot.lane.b32.xlu0 %v606, 12
      %v658 = vpop.permute.xlu0 %657
      %659 = vrot.lane.b32.xlu0 %v618, 12
      %v660 = vpop.permute.xlu0 %659
      %661 = vrot.lane.b32.xlu0 %v630, 12
      %v662 = vpop.permute.xlu0 %661
      %vm663 = vcmask 1046528
      %v664 = vrot.slane %v374, 1
      %v665 = vrot.slane %v422, 1
      %v666 = vsel %vm663, %v664, %v665
      %v667 = vrot.slane %v375, 1
      %v668 = vrot.slane %v423, 1
      %v669 = vsel %vm663, %v667, %v668
      %v670 = vrot.slane %v376, 1
      %v671 = vrot.slane %v424, 1
      %v672 = vsel %vm663, %v670, %v671
      %v673 = vrot.slane %v377, 1
      %v674 = vrot.slane %v425, 1
      %v675 = vsel %vm663, %v673, %v674
      %v676 = vrot.slane %v378, 1
      %v677 = vrot.slane %v426, 1
      %v678 = vsel %vm663, %v676, %v677
      %v679 = vrot.slane %v379, 1
      %v680 = vrot.slane %v427, 1
      %v681 = vsel %vm663, %v679, %v680
      %v682 = vrot.slane %v380, 1
      %v683 = vrot.slane %v428, 1
      %v684 = vsel %vm663, %v682, %v683
      %v685 = vrot.slane %v381, 1
      %v686 = vrot.slane %v429, 1
      %v687 = vsel %vm663, %v685, %v686
      %v688 = vrot.slane %v382, 1
      %v689 = vrot.slane %v430, 1
      %v690 = vsel %vm663, %v688, %v689
      %v691 = vrot.slane %v383, 1
      %v692 = vrot.slane %v431, 1
      %v693 = vsel %vm663, %v691, %v692
      %v694 = vrot.slane %v384, 1
      %v695 = vrot.slane %v432, 1
      %v696 = vsel %vm663, %v694, %v695
      %v697 = vrot.slane %v385, 1
      %v698 = vrot.slane %v433, 1
      %v699 = vsel %vm663, %v697, %v698
      %v700 = vrot.slane %v386, 1
      %v701 = vrot.slane %v434, 1
      %v702 = vsel %vm663, %v700, %v701
      %v703 = vrot.slane %v387, 1
      %v704 = vrot.slane %v435, 1
      %v705 = vsel %vm663, %v703, %v704
      %v706 = vrot.slane %v388, 1
      %v707 = vrot.slane %v436, 1
      %v708 = vsel %vm663, %v706, %v707
      %v709 = vrot.slane %v389, 1
      %v710 = vrot.slane %v437, 1
      %v711 = vsel %vm663, %v709, %v710
      %712 = vrot.lane.b32.xlu0 %v666, 24
      %v713 = vpop.permute.xlu0 %712
      %714 = vrot.lane.b32.xlu0 %v669, 24
      %v715 = vpop.permute.xlu0 %714
      %716 = vrot.lane.b32.xlu0 %v672, 24
      %v717 = vpop.permute.xlu0 %716
      %718 = vrot.lane.b32.xlu0 %v675, 24
      %v719 = vpop.permute.xlu0 %718
      %720 = vrot.lane.b32.xlu0 %v678, 24
      %v721 = vpop.permute.xlu0 %720
      %722 = vrot.lane.b32.xlu0 %v681, 24
      %v723 = vpop.permute.xlu0 %722
      %724 = vrot.lane.b32.xlu0 %v684, 24
      %v725 = vpop.permute.xlu0 %724
      %726 = vrot.lane.b32.xlu0 %v687, 24
      %v727 = vpop.permute.xlu0 %726
      %728 = vrot.lane.b32.xlu0 %v690, 24
      %v729 = vpop.permute.xlu0 %728
      %730 = vrot.lane.b32.xlu0 %v693, 24
      %v731 = vpop.permute.xlu0 %730
      %732 = vrot.lane.b32.xlu0 %v696, 24
      %v733 = vpop.permute.xlu0 %732
      %734 = vrot.lane.b32.xlu0 %v699, 24
      %v735 = vpop.permute.xlu0 %734
      %736 = vrot.lane.b32.xlu0 %v702, 24
      %v737 = vpop.permute.xlu0 %736
      %738 = vrot.lane.b32.xlu0 %v705, 24
      %v739 = vpop.permute.xlu0 %738
      %740 = vrot.lane.b32.xlu0 %v708, 24
      %v741 = vpop.permute.xlu0 %740
      %742 = vrot.lane.b32.xlu0 %v711, 24
      %v743 = vpop.permute.xlu0 %742
      %vm744 = vcmask 97280
      %v746 = vsel %vm744, %v374, %v632
      %v748 = vsel %vm744, %v375, %v634
      %v750 = vsel %vm744, %v376, %v636
      %v752 = vsel %vm744, %v377, %v638
      %v754 = vsel %vm744, %v378, %v640
      %v756 = vsel %vm744, %v379, %v642
      %v758 = vsel %vm744, %v380, %v644
      %v760 = vsel %vm744, %v381, %v646
      %v762 = vsel %vm744, %v382, %v648
      %v764 = vsel %vm744, %v383, %v650
      %v766 = vsel %vm744, %v384, %v652
      %v768 = vsel %vm744, %v385, %v654
      %v770 = vsel %vm744, %v386, %v656
      %v772 = vsel %vm744, %v387, %v658
      %v774 = vsel %vm744, %v388, %v660
      %v776 = vsel %vm744, %v389, %v662
      %vm777 = vcmask 195584
      %v779 = vsel %vm777, %v746, %v713
      %v781 = vsel %vm777, %v748, %v715
      %v783 = vsel %vm777, %v750, %v717
      %v785 = vsel %vm777, %v752, %v719
      %v787 = vsel %vm777, %v754, %v721
      %v789 = vsel %vm777, %v756, %v723
      %v791 = vsel %vm777, %v758, %v725
      %v793 = vsel %vm777, %v760, %v727
      %v795 = vsel %vm777, %v762, %v729
      %v797 = vsel %vm777, %v764, %v731
      %v799 = vsel %vm777, %v766, %v733
      %v801 = vsel %vm777, %v768, %v735
      %v803 = vsel %vm777, %v770, %v737
      %v805 = vsel %vm777, %v772, %v739
      %v807 = vsel %vm777, %v774, %v741
      %v809 = vsel %vm777, %v776, %v743
      %v810 = vld [vmem:[%s1] sm:$0xf]
      %v811 = vld [vmem:[%s1 + $0x4] sm:$0xf]
      %v812 = vld [vmem:[%s1 + $0x8] sm:$0xf]
      %v813 = vld [vmem:[%s1 + $0xc] sm:$0xf]
      %v814 = vld [vmem:[%s1 + $0x10] sm:$0x3]
      %v820 = vunpack.c.l.b16 %v810
      %v821 = vunpack.c.l.b16 %v811
      %v822 = vunpack.c.l.b16 %v812
      %v823 = vunpack.c.l.b16 %v813
      %v824 = vunpack.c.l.b16 %v814
      %v825 = vpack.c.b16 %v821, %v820
      %v826 = vpack.c.b16 %v823, %v822
      %v827 = vpack.c.b16 %v824, %v824
      %vm830 = vcmask 293888
      %v831 = vsel %vm830, %v779, 0
      %v833 = vsel %vm830, %v781, 0
      %v835 = vsel %vm830, %v783, 0
      %v837 = vsel %vm830, %v785, 0
      %v839 = vsel %vm830, %v787, 0
      %v841 = vsel %vm830, %v789, 0
      %v843 = vsel %vm830, %v791, 0
      %v845 = vsel %vm830, %v793, 0
      %v847 = vsel %vm830, %v795, 0
      %v849 = vsel %vm830, %v797, 0
      %v851 = vsel %vm830, %v799, 0
      %v853 = vsel %vm830, %v801, 0
      %v855 = vsel %vm830, %v803, 0
      %v857 = vsel %vm830, %v805, 0
      %v859 = vsel %vm830, %v807, 0
      %v861 = vsel %vm830, %v809, 0
      %vm863 = vcmask 1041408
      %v865 = vsel %vm863, %v827, 0
      %867 = vmatprep.subr.bf16.mxu0 0
      %868 = vmatpush1.bf16.msra.mxu0 %v825
      %869 = vmatprep.subr.bf16.mxu0 0
      %870 = vmatpush1.bf16.msra.mxu0 %v826
      %871 = vmatprep.subr.bf16.mxu0 0
      %872 = vmatpush1.bf16.msra.mxu0 %v865
      %873 = vmatprep.subr.bf16.mxu0 0
      %874 = vmatpush1.bf16.msra.mxu0 0
      %875 = vmatprep.subr.bf16.mxu0 0
      %876 = vmatpush1.bf16.msra.mxu0 0
      %877 = vmatprep.subr.bf16.mxu0 0
      %878 = vmatpush1.bf16.msra.mxu0 0
      %879 = vmatprep.subr.bf16.mxu0 0
      %880 = vmatpush1.bf16.msra.mxu0 0
      %881 = vmatprep.subr.bf16.mxu0 0
      %882 = vmatpush1.bf16.msra.mxu0 0
      %883 = vmatprep.subr.bf16.mxu0 0
      %884 = vmatpush1.bf16.msra.mxu0 0
      %885 = vmatprep.subr.bf16.mxu0 0
      %886 = vmatpush1.bf16.msra.mxu0 0
      %887 = vmatprep.subr.bf16.mxu0 0
      %888 = vmatpush1.bf16.msra.mxu0 0
      %889 = vmatprep.subr.bf16.mxu0 0
      %890 = vmatpush1.bf16.msra.mxu0 0
      %891 = vmatprep.subr.bf16.mxu0 0
      %892 = vmatpush1.bf16.msra.mxu0 0
      %893 = vmatprep.subr.bf16.mxu0 0
      %894 = vmatpush1.bf16.msra.mxu0 0
      %895 = vmatprep.subr.bf16.mxu0 0
      %896 = vmatpush1.bf16.msra.mxu0 0
      %897 = vmatprep.subr.bf16.mxu0 0
      %898 = vmatpush1.bf16.msra.mxu0 0
      %899 = vmatprep.mubr.bf16.mxu0 0
      %900 = vmatmul.mubr.bf16.gmra.mrb[0].mxu0 %v831
      %v901 = vpop.f32.mrb[0].mxu0
      %v902 = vadd.f32 0.0, %v901
      %v903 = vpop.f32.mrb[0].mxu0
      %v904 = vpop.f32.mrb[0].mxu0
      %v905 = vadd.f32 0.0, %v904
      %v906 = vpop.f32.mrb[0].mxu0
      %907 = vmatprep.mubr.bf16.mxu0 0
      %908 = vmatmul.mubr.bf16.gmra.mrb[0].mxu0 %v833
      %v909 = vpop.f32.mrb[0].mxu0
      %v910 = vadd.f32 0.0, %v909
      %v911 = vpop.f32.mrb[0].mxu0
      %v912 = vpop.f32.mrb[0].mxu0
      %v913 = vadd.f32 0.0, %v912
      %v914 = vpop.f32.mrb[0].mxu0
      %915 = vmatprep.mubr.bf16.mxu0 0
      %916 = vmatmul.mubr.bf16.gmra.mrb[0].mxu0 %v835
      %v917 = vpop.f32.mrb[0].mxu0
      %v918 = vadd.f32 0.0, %v917
      %v919 = vpop.f32.mrb[0].mxu0
      %v920 = vpop.f32.mrb[0].mxu0
      %v921 = vadd.f32 0.0, %v920
      %v922 = vpop.f32.mrb[0].mxu0
      %923 = vmatprep.mubr.bf16.mxu0 0
      %924 = vmatmul.mubr.bf16.gmra.mrb[0].mxu0 %v837
      %v925 = vpop.f32.mrb[0].mxu0
      %v926 = vadd.f32 0.0, %v925
      %v927 = vpop.f32.mrb[0].mxu0
      %v928 = vpop.f32.mrb[0].mxu0
      %v929 = vadd.f32 0.0, %v928
      %v930 = vpop.f32.mrb[0].mxu0
      %931 = vmatprep.mubr.bf16.mxu0 0
      %932 = vmatmul.mubr.bf16.gmra.mrb[0].mxu0 %v839
      %v933 = vpop.f32.mrb[0].mxu0
      %v934 = vadd.f32 0.0, %v933
      %v935 = vpop.f32.mrb[0].mxu0
      %v936 = vpop.f32.mrb[0].mxu0
      %v937 = vadd.f32 0.0, %v936
      %v938 = vpop.f32.mrb[0].mxu0
      %939 = vmatprep.mubr.bf16.mxu0 0
      %940 = vmatmul.mubr.bf16.gmra.mrb[0].mxu0 %v841
      %v941 = vpop.f32.mrb[0].mxu0
      %v942 = vadd.f32 0.0, %v941
      %v943 = vpop.f32.mrb[0].mxu0
      %v944 = vpop.f32.mrb[0].mxu0
      %v945 = vadd.f32 0.0, %v944
      %v946 = vpop.f32.mrb[0].mxu0
      %947 = vmatprep.mubr.bf16.mxu0 0
      %948 = vmatmul.mubr.bf16.gmra.mrb[0].mxu0 %v843
      %v949 = vpop.f32.mrb[0].mxu0
      %v950 = vadd.f32 0.0, %v949
      %v951 = vpop.f32.mrb[0].mxu0
      %v952 = vpop.f32.mrb[0].mxu0
      %v953 = vadd.f32 0.0, %v952
      %v954 = vpop.f32.mrb[0].mxu0
      %955 = vmatprep.mubr.bf16.mxu0 0
      %956 = vmatmul.mubr.bf16.gmra.mrb[0].mxu0 %v845
      %v957 = vpop.f32.mrb[0].mxu0
      %v958 = vadd.f32 0.0, %v957
      %v959 = vpop.f32.mrb[0].mxu0
      %v960 = vpop.f32.mrb[0].mxu0
      %v961 = vadd.f32 0.0, %v960
      %v962 = vpop.f32.mrb[0].mxu0
      %963 = vmatprep.mubr.bf16.mxu0 0
      %964 = vmatmul.mubr.bf16.gmra.mrb[0].mxu0 %v847
      %v965 = vpop.f32.mrb[0].mxu0
      %v966 = vadd.f32 0.0, %v965
      %v967 = vpop.f32.mrb[0].mxu0
      %v968 = vpop.f32.mrb[0].mxu0
      %v969 = vadd.f32 0.0, %v968
      %v970 = vpop.f32.mrb[0].mxu0
      %971 = vmatprep.mubr.bf16.mxu0 0
      %972 = vmatmul.mubr.bf16.gmra.mrb[0].mxu0 %v849
      %v973 = vpop.f32.mrb[0].mxu0
      %v974 = vadd.f32 0.0, %v973
      %v975 = vpop.f32.mrb[0].mxu0
      %v976 = vpop.f32.mrb[0].mxu0
      %v977 = vadd.f32 0.0, %v976
      %v978 = vpop.f32.mrb[0].mxu0
      %979 = vmatprep.mubr.bf16.mxu0 0
      %980 = vmatmul.mubr.bf16.gmra.mrb[0].mxu0 %v851
      %v981 = vpop.f32.mrb[0].mxu0
      %v982 = vadd.f32 0.0, %v981
      %v983 = vpop.f32.mrb[0].mxu0
      %v984 = vpop.f32.mrb[0].mxu0
      %v985 = vadd.f32 0.0, %v984
      %v986 = vpop.f32.mrb[0].mxu0
      %987 = vmatprep.mubr.bf16.mxu0 0
      %988 = vmatmul.mubr.bf16.gmra.mrb[0].mxu0 %v853
      %v989 = vpop.f32.mrb[0].mxu0
      %v990 = vadd.f32 0.0, %v989
      %v991 = vpop.f32.mrb[0].mxu0
      %v992 = vpop.f32.mrb[0].mxu0
      %v993 = vadd.f32 0.0, %v992
      %v994 = vpop.f32.mrb[0].mxu0
      %995 = vmatprep.mubr.bf16.mxu0 0
      %996 = vmatmul.mubr.bf16.gmra.mrb[0].mxu0 %v855
      %v997 = vpop.f32.mrb[0].mxu0
      %v998 = vadd.f32 0.0, %v997
      %v999 = vpop.f32.mrb[0].mxu0
      %v1000 = vpop.f32.mrb[0].mxu0
      %v1001 = vadd.f32 0.0, %v1000
      %v1002 = vpop.f32.mrb[0].mxu0
      %1003 = vmatprep.mubr.bf16.mxu0 0
      %1004 = vmatmul.mubr.bf16.gmra.mrb[0].mxu0 %v857
      %v1005 = vpop.f32.mrb[0].mxu0
      %v1006 = vadd.f32 0.0, %v1005
      %v1007 = vpop.f32.mrb[0].mxu0
      %v1008 = vpop.f32.mrb[0].mxu0
      %v1009 = vadd.f32 0.0, %v1008
      %v1010 = vpop.f32.mrb[0].mxu0
      %1011 = vmatprep.mubr.bf16.mxu0 0
      %1012 = vmatmul.mubr.bf16.gmra.mrb[0].mxu0 %v859
      %v1013 = vpop.f32.mrb[0].mxu0
      %v1014 = vadd.f32 0.0, %v1013
      %v1015 = vpop.f32.mrb[0].mxu0
      %v1016 = vpop.f32.mrb[0].mxu0
      %v1017 = vadd.f32 0.0, %v1016
      %v1018 = vpop.f32.mrb[0].mxu0
      %1019 = vmatprep.mubr.bf16.mxu0 0
      %1020 = vmatmul.mubr.bf16.gmra.mrb[0].mxu0 %v861
      %v1021 = vpop.f32.mrb[0].mxu0
      %v1022 = vadd.f32 0.0, %v1021
      %v1023 = vpop.f32.mrb[0].mxu0
      %v1024 = vpop.f32.mrb[0].mxu0
      %v1025 = vadd.f32 0.0, %v1024
      %v1026 = vpop.f32.mrb[0].mxu0
      %1027 = vdwg.mxu0
      %v1028 = vpack.c.bf16 %v905, %v902
      %v1029 = vpack.c.bf16 %v913, %v910
      %v1030 = vpack.c.bf16 %v921, %v918
      %v1031 = vpack.c.bf16 %v929, %v926
      %v1032 = vpack.c.bf16 %v937, %v934
      %v1033 = vpack.c.bf16 %v945, %v942
      %v1034 = vpack.c.bf16 %v953, %v950
      %v1035 = vpack.c.bf16 %v961, %v958
      %v1036 = vpack.c.bf16 %v969, %v966
      %v1037 = vpack.c.bf16 %v977, %v974
      %v1038 = vpack.c.bf16 %v985, %v982
      %v1039 = vpack.c.bf16 %v993, %v990
      %v1040 = vpack.c.bf16 %v1001, %v998
      %v1041 = vpack.c.bf16 %v1009, %v1006
      %v1042 = vpack.c.bf16 %v1017, %v1014
      %v1043 = vpack.c.bf16 %v1025, %v1022
      %v1060 = vunpack.c.l.b16 %v1028
      %v1061 = vunpack.c.h.b16 %v1028
      %v1062 = vunpack.c.l.b16 %v1029
      %v1063 = vunpack.c.h.b16 %v1029
      %v1064 = vunpack.c.l.b16 %v1030
      %v1065 = vunpack.c.h.b16 %v1030
      %v1066 = vunpack.c.l.b16 %v1031
      %v1067 = vunpack.c.h.b16 %v1031
      %v1068 = vunpack.c.l.b16 %v1032
      %v1069 = vunpack.c.h.b16 %v1032
      %v1070 = vunpack.c.l.b16 %v1033
      %v1071 = vunpack.c.h.b16 %v1033
      %v1072 = vunpack.c.l.b16 %v1034
      %v1073 = vunpack.c.h.b16 %v1034
      %v1074 = vunpack.c.l.b16 %v1035
      %v1075 = vunpack.c.h.b16 %v1035
      %v1076 = vunpack.c.l.b16 %v1036
      %v1077 = vunpack.c.h.b16 %v1036
      %v1078 = vunpack.c.l.b16 %v1037
      %v1079 = vunpack.c.h.b16 %v1037
      %v1080 = vunpack.c.l.b16 %v1038
      %v1081 = vunpack.c.h.b16 %v1038
      %v1082 = vunpack.c.l.b16 %v1039
      %v1083 = vunpack.c.h.b16 %v1039
      %v1084 = vunpack.c.l.b16 %v1040
      %v1085 = vunpack.c.h.b16 %v1040
      %v1086 = vunpack.c.l.b16 %v1041
      %v1087 = vunpack.c.h.b16 %v1041
      %v1088 = vunpack.c.l.b16 %v1042
      %v1089 = vunpack.c.h.b16 %v1042
      %v1090 = vunpack.c.l.b16 %v1043
      %v1091 = vunpack.c.h.b16 %v1043
      %v1092 = vpack.c.b16 %v1060, %v1060
      %v1093 = vpack.c.b16 %v1061, %v1061
      %v1094 = vpack.c.b16 %v1062, %v1062
      %v1095 = vpack.c.b16 %v1063, %v1063
      %v1096 = vpack.c.b16 %v1064, %v1064
      %v1097 = vpack.c.b16 %v1065, %v1065
      %v1098 = vpack.c.b16 %v1066, %v1066
      %v1099 = vpack.c.b16 %v1067, %v1067
      %v1100 = vpack.c.b16 %v1068, %v1068
      %v1101 = vpack.c.b16 %v1069, %v1069
      %v1102 = vpack.c.b16 %v1070, %v1070
      %v1103 = vpack.c.b16 %v1071, %v1071
      %v1104 = vpack.c.b16 %v1072, %v1072
      %v1105 = vpack.c.b16 %v1073, %v1073
      %v1106 = vpack.c.b16 %v1074, %v1074
      %v1107 = vpack.c.b16 %v1075, %v1075
      %v1108 = vpack.c.b16 %v1076, %v1076
      %v1109 = vpack.c.b16 %v1077, %v1077
      %v1110 = vpack.c.b16 %v1078, %v1078
      %v1111 = vpack.c.b16 %v1079, %v1079
      %v1112 = vpack.c.b16 %v1080, %v1080
      %v1113 = vpack.c.b16 %v1081, %v1081
      %v1114 = vpack.c.b16 %v1082, %v1082
      %v1115 = vpack.c.b16 %v1083, %v1083
      %v1116 = vpack.c.b16 %v1084, %v1084
      %v1117 = vpack.c.b16 %v1085, %v1085
      %v1118 = vpack.c.b16 %v1086, %v1086
      %v1119 = vpack.c.b16 %v1087, %v1087
      %v1120 = vpack.c.b16 %v1088, %v1088
      %v1121 = vpack.c.b16 %v1089, %v1089
      %v1122 = vpack.c.b16 %v1090, %v1090
      %v1123 = vpack.c.b16 %v1091, %v1091
      %1156 = vst [vmem:[%s249] sm:$0xf] %v1092
      %1157 = vst [vmem:[%s249 + $0x4] sm:$0xf] %v1093
      %1158 = vst [vmem:[%s249 + $0x8] sm:$0xf] %v1094
      %1159 = vst [vmem:[%s249 + $0xc] sm:$0xf] %v1095
      %1160 = vst [vmem:[%s249 + $0x10] sm:$0xf] %v1096
      %1161 = vst [vmem:[%s249 + $0x14] sm:$0xf] %v1097
      %1162 = vst [vmem:[%s249 + $0x18] sm:$0xf] %v1098
      %1163 = vst [vmem:[%s249 + $0x1c] sm:$0xf] %v1099
      %1164 = vst [vmem:[%s249 + $0x20] sm:$0xf] %v1100
      %1165 = vst [vmem:[%s249 + $0x24] sm:$0xf] %v1101
      %1166 = vst [vmem:[%s249 + $0x28] sm:$0xf] %v1102
      %1167 = vst [vmem:[%s249 + $0x2c] sm:$0xf] %v1103
      %1168 = vst [vmem:[%s249 + $0x30] sm:$0xf] %v1104
      %1169 = vst [vmem:[%s249 + $0x34] sm:$0xf] %v1105
      %1170 = vst [vmem:[%s249 + $0x38] sm:$0xf] %v1106
      %1171 = vst [vmem:[%s249 + $0x3c] sm:$0xf] %v1107
      %1172 = vst [vmem:[%s249 + $0x40] sm:$0xf] %v1108
      %1173 = vst [vmem:[%s249 + $0x44] sm:$0xf] %v1109
      %1174 = vst [vmem:[%s249 + $0x48] sm:$0xf] %v1110
      %1175 = vst [vmem:[%s249 + $0x4c] sm:$0xf] %v1111
      %1176 = vst [vmem:[%s249 + $0x50] sm:$0xf] %v1112
      %1177 = vst [vmem:[%s249 + $0x54] sm:$0xf] %v1113
      %1178 = vst [vmem:[%s249 + $0x58] sm:$0xf] %v1114
      %1179 = vst [vmem:[%s249 + $0x5c] sm:$0xf] %v1115
      %1180 = vst [vmem:[%s249 + $0x60] sm:$0xf] %v1116
      %1181 = vst [vmem:[%s249 + $0x64] sm:$0xf] %v1117
      %1182 = vst [vmem:[%s249 + $0x68] sm:$0xf] %v1118
      %1183 = vst [vmem:[%s249 + $0x6c] sm:$0xf] %v1119
      %1184 = vst [vmem:[%s249 + $0x70] sm:$0xf] %v1120
      %1185 = vst [vmem:[%s249 + $0x74] sm:$0xf] %v1121
      %1186 = vst [vmem:[%s249 + $0x78] sm:$0xf] %v1122
      %1187 = vst [vmem:[%s249 + $0x7c] sm:$0xf] %v1123
      %v1188 = vadd.f32 %v902, %v905
      %v1189 = vadd.f32 %v1188, %v910
      %v1190 = vadd.f32 %v1189, %v913
      %v1191 = vadd.f32 %v1190, %v918
      %v1192 = vadd.f32 %v1191, %v921
      %v1193 = vadd.f32 %v1192, %v926
      %v1194 = vadd.f32 %v1193, %v929
      %v1195 = vadd.f32 %v1194, %v934
      %v1196 = vadd.f32 %v1195, %v937
      %v1197 = vadd.f32 %v1196, %v942
      %v1198 = vadd.f32 %v1197, %v945
      %v1199 = vadd.f32 %v1198, %v950
      %v1200 = vadd.f32 %v1199, %v953
      %v1201 = vadd.f32 %v1200, %v958
      %v1202 = vadd.f32 %v1201, %v961
      %v1203 = vadd.f32 %v1202, %v966
      %v1204 = vadd.f32 %v1203, %v969
      %v1205 = vadd.f32 %v1204, %v974
      %v1206 = vadd.f32 %v1205, %v977
      %v1207 = vadd.f32 %v1206, %v982
      %v1208 = vadd.f32 %v1207, %v985
      %v1209 = vadd.f32 %v1208, %v990
      %v1210 = vadd.f32 %v1209, %v993
      %v1211 = vadd.f32 %v1210, %v998
      %v1212 = vadd.f32 %v1211, %v1001
      %v1213 = vadd.f32 %v1212, %v1006
      %v1214 = vadd.f32 %v1213, %v1009
      %v1215 = vadd.f32 %v1214, %v1014
      %v1216 = vadd.f32 %v1215, %v1017
      %v1217 = vadd.f32 %v1216, %v1022
      %v1218 = vadd.f32 %v1217, %v1025
      %v1219 = vrot.slane %v1218, 4
      %v1220 = vadd.f32 %v1218, %v1219
      %v1221 = vrot.slane %v1220, 2
      %v1222 = vadd.f32 %v1220, %v1221
      %v1223 = vrot.slane %v1222, 1
      %v1224 = vadd.f32 %v1222, %v1223
      %1225 = vst [vmem:[%s254] sm:$0x1] %v1224
      %v1226 = vmul.f32 %v902, %v902
      %v1227 = vmul.f32 %v905, %v905
      %v1228 = vmul.f32 %v910, %v910
      %v1229 = vmul.f32 %v913, %v913
      %v1230 = vmul.f32 %v918, %v918
      %v1231 = vmul.f32 %v921, %v921
      %v1232 = vmul.f32 %v926, %v926
      %v1233 = vmul.f32 %v929, %v929
      %v1234 = vmul.f32 %v934, %v934
      %v1235 = vmul.f32 %v937, %v937
      %v1236 = vmul.f32 %v942, %v942
      %v1237 = vmul.f32 %v945, %v945
      %v1238 = vmul.f32 %v950, %v950
      %v1239 = vmul.f32 %v953, %v953
      %v1240 = vmul.f32 %v958, %v958
      %v1241 = vmul.f32 %v961, %v961
      %v1242 = vmul.f32 %v966, %v966
      %v1243 = vmul.f32 %v969, %v969
      %v1244 = vmul.f32 %v974, %v974
      %v1245 = vmul.f32 %v977, %v977
      %v1246 = vmul.f32 %v982, %v982
      %v1247 = vmul.f32 %v985, %v985
      %v1248 = vmul.f32 %v990, %v990
      %v1249 = vmul.f32 %v993, %v993
      %v1250 = vmul.f32 %v998, %v998
      %v1251 = vmul.f32 %v1001, %v1001
      %v1252 = vmul.f32 %v1006, %v1006
      %v1253 = vmul.f32 %v1009, %v1009
      %v1254 = vmul.f32 %v1014, %v1014
      %v1255 = vmul.f32 %v1017, %v1017
      %v1256 = vmul.f32 %v1022, %v1022
      %v1257 = vmul.f32 %v1025, %v1025
      %v1258 = vadd.f32 %v1226, %v1227
      %v1259 = vadd.f32 %v1258, %v1228
      %v1260 = vadd.f32 %v1259, %v1229
      %v1261 = vadd.f32 %v1260, %v1230
      %v1262 = vadd.f32 %v1261, %v1231
      %v1263 = vadd.f32 %v1262, %v1232
      %v1264 = vadd.f32 %v1263, %v1233
      %v1265 = vadd.f32 %v1264, %v1234
      %v1266 = vadd.f32 %v1265, %v1235
      %v1267 = vadd.f32 %v1266, %v1236
      %v1268 = vadd.f32 %v1267, %v1237
      %v1269 = vadd.f32 %v1268, %v1238
      %v1270 = vadd.f32 %v1269, %v1239
      %v1271 = vadd.f32 %v1270, %v1240
      %v1272 = vadd.f32 %v1271, %v1241
      %v1273 = vadd.f32 %v1272, %v1242
      %v1274 = vadd.f32 %v1273, %v1243
      %v1275 = vadd.f32 %v1274, %v1244
      %v1276 = vadd.f32 %v1275, %v1245
      %v1277 = vadd.f32 %v1276, %v1246
      %v1278 = vadd.f32 %v1277, %v1247
      %v1279 = vadd.f32 %v1278, %v1248
      %v1280 = vadd.f32 %v1279, %v1249
      %v1281 = vadd.f32 %v1280, %v1250
      %v1282 = vadd.f32 %v1281, %v1251
      %v1283 = vadd.f32 %v1282, %v1252
      %v1284 = vadd.f32 %v1283, %v1253
      %v1285 = vadd.f32 %v1284, %v1254
      %v1286 = vadd.f32 %v1285, %v1255
      %v1287 = vadd.f32 %v1286, %v1256
      %v1288 = vadd.f32 %v1287, %v1257
      %v1289 = vrot.slane %v1288, 4
      %v1290 = vadd.f32 %v1288, %v1289
      %v1291 = vrot.slane %v1290, 2
      %v1292 = vadd.f32 %v1290, %v1291
      %v1293 = vrot.slane %v1292, 1
      %v1294 = vadd.f32 %v1292, %v1293
      %1295 = vst [vmem:[%s259] sm:$0x1] %v1294
      %s1296 = sadd.s32 %s20, %s21
      %p1297 = scmp.lt.s32.totalorder %s1296, 1
      %s1298 = scalar_select %p1297, %s1296, 1
      %s1299 = smul.addr %s1298, 32
      %s1300 = smul.addr %s1299, 4
      %s1301 = scalar_lea.vmem %s2, %s1300
      %s1302 = sadd.s32 %s20, %s21
      %p1303 = scmp.lt.s32.totalorder %s1302, 1
      %s1304 = scalar_select %p1303, %s1302, 1
      %s1305 = scalar_lea.vmem %s3, %s1304
      %s1306 = sadd.s32 %s20, %s21
      %p1307 = scmp.lt.s32.totalorder %s1306, 1
      %s1308 = scalar_select %p1307, %s1306, 1
      %s1309 = scalar_lea.vmem %s4, %s1308
      // Predicated region
      $region29: #{double_conv.3} parent=27 // pred_check
        %p1310 = pneg %p97
      $region30: #{double_conv.3} parent=27 // pred_check_branch
        %1312 = sbr.rel (%p1310) target = $region32
      $region31: #{double_conv.3} parent=27 // pred_region
        %s1313 = sadd.s32 %s20, %s21
      $region32: #{double_conv.3} parent=27 // pred_fallthru
        _
      // Predicated region
      $region33: #{double_conv.3} parent=27 // pred_check
        %p1314 = pneg %p125
      $region34: #{double_conv.3} parent=27 // pred_check_branch
        %1316 = sbr.rel (%p1314) target = $region36
      $region35: #{double_conv.3} parent=27 // pred_region
        %s1317 = sadd.s32 %s20, %s21
      $region36: #{double_conv.3} parent=27 // pred_fallthru
        _
      // Predicated region
      $region37: #{double_conv.3} parent=27 // pred_check
        %p1318 = pneg %p153
      $region38: #{double_conv.3} parent=27 // pred_check_branch
        %1320 = sbr.rel (%p1318) target = $region40
      $region39: #{double_conv.3} parent=27 // pred_region
        %s1321 = sadd.s32 %s20, %s21
      $region40: #{double_conv.3} parent=27 // pred_fallthru
        _
    $region28: #{double_conv.3} parent=5 // pred_fallthru
      _
    %p1322 = scmp.le.s32.totalorder 2, %s11
    // Predicated region
    $region41: #{double_conv.3} parent=5 // pred_check
      %p1323 = pneg %p1322
    $region42: #{double_conv.3} parent=5 // pred_check_branch
      %1325 = sbr.rel (%p1323) target = $region44
    $region43: #{double_conv.3} parent=5 // pred_region
      %s1326 = ssub.s32 %s11, 2
      // Predicated region
      $region45: #{double_conv.3} parent=43 // pred_check
        %p1327 = pneg %p103
      $region46: #{double_conv.3} parent=43 // pred_check_branch
        %1329 = sbr.rel (%p1327) target = $region48
      $region47: #{double_conv.3} parent=43 // pred_region
        %s1330 = sadd.s32 %s22, %s23
        %p1331 = scmp.lt.s32.totalorder %s1330, 1
        %s1332 = scalar_select %p1331, %s1330, 1
        %s1333 = smul.addr %s1332, 32
        %s1334 = smul.addr %s1333, 4
        %s1335 = scalar_lea.vmem %s2, %s1334
      $region48: #{double_conv.3} parent=43 // pred_fallthru
        _
      // Predicated region
      $region49: #{double_conv.3} parent=43 // pred_check
        %p1336 = pneg %p131
      $region50: #{double_conv.3} parent=43 // pred_check_branch
        %1338 = sbr.rel (%p1336) target = $region52
      $region51: #{double_conv.3} parent=43 // pred_region
        %s1339 = sadd.s32 %s22, %s23
        %p1340 = scmp.lt.s32.totalorder %s1339, 1
        %s1341 = scalar_select %p1340, %s1339, 1
        %s1342 = scalar_lea.vmem %s3, %s1341
      $region52: #{double_conv.3} parent=43 // pred_fallthru
        _
      // Predicated region
      $region53: #{double_conv.3} parent=43 // pred_check
        %p1343 = pneg %p159
      $region54: #{double_conv.3} parent=43 // pred_check_branch
        %1345 = sbr.rel (%p1343) target = $region56
      $region55: #{double_conv.3} parent=43 // pred_region
        %s1346 = sadd.s32 %s22, %s23
        %p1347 = scmp.lt.s32.totalorder %s1346, 1
        %s1348 = scalar_select %p1347, %s1346, 1
        %s1349 = scalar_lea.vmem %s4, %s1348
      $region56: #{double_conv.3} parent=43 // pred_fallthru
        _
    $region44: #{double_conv.3} parent=5 // pred_fallthru
      _
  $region6: #{double_conv.3} parent=0 // loop_footer
    %s15 = sadd.s32 1, %s11
  $region7: #{double_conv.3} parent=0 // loop_footer_branch
    %10 = sbr.rel target = $region3
  $region8: #{double_conv.3} parent=0 // loop_exit
    _

// kernel: double_conv.5
$region0: #{double_conv.5}
  #allocation0 [shape = 'u32[]', space=smem, size = 0x4, offset = 0x4, fixed_abs, tag = 'smem constant byte address 0x4 - core index']
  #allocation1 [shape = 'u32[144,128]{1,0:T(1,128)}', space=vmem, size = 0x12000, scoped, tag = 'internal scratch']
  %s0 = inlined_call_operand.vmem [shape: bf16[2,256,128], index: 0, kind: input, shape index: {}]
  %s1 = inlined_call_operand.vmem [shape: f32[1,128], index: 1, kind: input, shape index: {}]
  %s2 = inlined_call_operand.vmem [shape: f32[1,128], index: 2, kind: input, shape index: {}]
  %s3 = inlined_call_operand.vmem [shape: f32[2,256,128], index: 3, kind: output, shape index: {}]
  %s4 = sld [smem:[#allocation0]]
  $region45: #{double_conv.5} parent=0
    _
  %s6 = ssub.s32 1, %s4
  %s7 = scalar_select 0, %s6, %s4
  loop: start=0, step=1, limit=4
  $region2: #{double_conv.5} parent=0 // loop_pre_header
    _
  $region3: #{double_conv.5} parent=0 // loop_header
    %s9 = sphi 0, %s13
    %p10 = scmp.ge.s32.totalorder %s9, 4
    %s19 = sphi 0, %s21
    %s22 = sphi 0, %s19
    %s23 = sphi 0, %s22
    %s39 = sphi 0, %s23
    %s43 = sphi 0, %s43
    %s45 = sphi 0, %s43
    %s46 = sphi 0, %s45
    %s60 = sphi 0, %s46
    %s64 = sphi 0, %s64
    %s66 = sphi 0, %s64
    %s67 = sphi 0, %s66
    %s81 = sphi 0, %s67
    %s87 = sphi 0, %s89
    %s90 = sphi 0, %s87
    %s91 = sphi 0, %s90
    %s107 = sphi 0, %s91
  $region4: #{double_conv.5} parent=0 // loop_header_branch
    %12 = sbr.rel (%p10) target = $region8
  $region5: #{double_conv.5} parent=0 // loop_body
    %s14 = ssub.s32 %s9, 1
    %s15 = ssub.s32 %s9, 2
    %s16 = sadd.s32 %s9, 1
    %s17 = ssub.s32 %s9, %s16
    %p18 = scmp.eq.s32.totalorder %s17, 0
    %s20 = sadd.s32 %s19, 1
    %s21 = scalar_select %p18, %s19, %s20
    %p24 = pneg %p18
    %p25 = scmp.eq.s32.totalorder %s9, 1
    %p26 = por %p24, %p25
    %p27 = scmp.ne.s32.totalorder %s19, %s22
    %p28 = scmp.eq.s32.totalorder %s9, 0
    %p29 = por %p27, %p28
    %p30 = scmp.ne.s32.totalorder %s19, %s22
    %p31 = scmp.eq.s32.totalorder %s14, 1
    %p32 = por %p30, %p31
    %p33 = scmp.ne.s32.totalorder %s22, %s23
    %p34 = scmp.eq.s32.totalorder %s14, 0
    %p35 = por %p33, %p34
    %p36 = scmp.ne.s32.totalorder %s22, %s23
    %p37 = scmp.eq.s32.totalorder %s15, 1
    %p38 = por %p36, %p37
    %p40 = scmp.ne.s32.totalorder %s23, %s39
    %p41 = scmp.eq.s32.totalorder %s15, 0
    %p42 = por %p40, %p41
    %s44 = sadd.s32 %s43, 1
    %p47 = scmp.eq.s32.totalorder %s9, 1
    %p48 = scmp.ne.s32.totalorder %s43, %s45
    %p49 = scmp.eq.s32.totalorder %s9, 0
    %p50 = por %p48, %p49
    %p51 = scmp.ne.s32.totalorder %s43, %s45
    %p52 = scmp.eq.s32.totalorder %s14, 1
    %p53 = por %p51, %p52
    %p54 = scmp.ne.s32.totalorder %s45, %s46
    %p55 = scmp.eq.s32.totalorder %s14, 0
    %p56 = por %p54, %p55
    %p57 = scmp.ne.s32.totalorder %s45, %s46
    %p58 = scmp.eq.s32.totalorder %s15, 1
    %p59 = por %p57, %p58
    %p61 = scmp.ne.s32.totalorder %s46, %s60
    %p62 = scmp.eq.s32.totalorder %s15, 0
    %p63 = por %p61, %p62
    %s65 = sadd.s32 %s64, 1
    %p68 = scmp.eq.s32.totalorder %s9, 1
    %p69 = scmp.ne.s32.totalorder %s64, %s66
    %p70 = scmp.eq.s32.totalorder %s9, 0
    %p71 = por %p69, %p70
    %p72 = scmp.ne.s32.totalorder %s64, %s66
    %p73 = scmp.eq.s32.totalorder %s14, 1
    %p74 = por %p72, %p73
    %p75 = scmp.ne.s32.totalorder %s66, %s67
    %p76 = scmp.eq.s32.totalorder %s14, 0
    %p77 = por %p75, %p76
    %p78 = scmp.ne.s32.totalorder %s66, %s67
    %p79 = scmp.eq.s32.totalorder %s15, 1
    %p80 = por %p78, %p79
    %p82 = scmp.ne.s32.totalorder %s67, %s81
    %p83 = scmp.eq.s32.totalorder %s15, 0
    %p84 = por %p82, %p83
    %s85 = ssub.s32 %s9, %s16
    %p86 = scmp.eq.s32.totalorder %s85, 0
    %s88 = sadd.s32 %s87, 1
    %s89 = scalar_select %p86, %s87, %s88
    %p92 = pneg %p86
    %p93 = scmp.eq.s32.totalorder %s9, 1
    %p94 = por %p92, %p93
    %p95 = scmp.ne.s32.totalorder %s87, %s90
    %p96 = scmp.eq.s32.totalorder %s9, 0
    %p97 = por %p95, %p96
    %p98 = scmp.ne.s32.totalorder %s87, %s90
    %p99 = scmp.eq.s32.totalorder %s14, 1
    %p100 = por %p98, %p99
    %p101 = scmp.ne.s32.totalorder %s90, %s91
    %p102 = scmp.eq.s32.totalorder %s14, 0
    %p103 = por %p101, %p102
    %p104 = scmp.ne.s32.totalorder %s90, %s91
    %p105 = scmp.eq.s32.totalorder %s15, 1
    %p106 = por %p104, %p105
    %p108 = scmp.ne.s32.totalorder %s91, %s107
    %p109 = scmp.eq.s32.totalorder %s15, 0
    %p110 = por %p108, %p109
    %p111 = scmp.le.s32.totalorder 1, %s9
    %p112 = scmp.lt.s32.totalorder %s9, 3
    %p113 = pnand %p111, %p112
    %p114 = pneg %p113
    // Predicated region
    $region9: #{double_conv.5} parent=5 // pred_check
      _
    $region10: #{double_conv.5} parent=5 // pred_check_branch
      %116 = sbr.rel (%p113) target = $region12
    $region11: #{double_conv.5} parent=5 // pred_region
      %s117 = ssub.s32 %s9, 1
      // Predicated region
      $region13: #{double_conv.5} parent=11 // pred_check
        %p118 = pneg %p56
      $region14: #{double_conv.5} parent=11 // pred_check_branch
        %120 = sbr.rel (%p118) target = $region16
      $region15: #{double_conv.5} parent=11 // pred_region
        _
      $region16: #{double_conv.5} parent=11 // pred_fallthru
        _
      // Predicated region
      $region17: #{double_conv.5} parent=11 // pred_check
        %p121 = pneg %p77
      $region18: #{double_conv.5} parent=11 // pred_check_branch
        %123 = sbr.rel (%p121) target = $region20
      $region19: #{double_conv.5} parent=11 // pred_region
        _
      $region20: #{double_conv.5} parent=11 // pred_fallthru
        _
    $region12: #{double_conv.5} parent=5 // pred_fallthru
      _
    %p124 = scmp.lt.s32.totalorder %s9, 2
    // Predicated region
    $region21: #{double_conv.5} parent=5 // pred_check
      %p125 = pneg %p124
    $region22: #{double_conv.5} parent=5 // pred_check_branch
      %127 = sbr.rel (%p125) target = $region24
    $region23: #{double_conv.5} parent=5 // pred_region
      // Predicated region
      $region25: #{double_conv.5} parent=23 // pred_check
        %p128 = pneg %p29
      $region26: #{double_conv.5} parent=23 // pred_check_branch
        %130 = sbr.rel (%p128) target = $region28
      $region27: #{double_conv.5} parent=23 // pred_region
        %p131 = scmp.lt.s32.totalorder %s9, 1
        %s132 = scalar_select %p131, %s9, 1
        %s133 = smul.addr %s132, 32
        %s134 = smul.addr %s133, 4
        %s135 = scalar_lea.vmem %s0, %s134
      $region28: #{double_conv.5} parent=23 // pred_fallthru
        _
    $region24: #{double_conv.5} parent=5 // pred_fallthru
      _
    %p136 = scmp.le.s32.totalorder 1, %s9
    %p137 = scmp.lt.s32.totalorder %s9, 3
    %p138 = pnand %p136, %p137
    %p139 = pneg %p138
    // Predicated region
    $region29: #{double_conv.5} parent=5 // pred_check
      _
    $region30: #{double_conv.5} parent=5 // pred_check_branch
      %141 = sbr.rel (%p138) target = $region32
    $region31: #{double_conv.5} parent=5 // pred_region
      %s142 = ssub.s32 %s9, 1
      %p143 = scmp.lt.s32.totalorder %s14, 1
      %s144 = scalar_select %p143, %s14, 1
      %s145 = smul.addr %s144, 32
      %s146 = smul.addr %s145, 4
      %s147 = scalar_lea.vmem %s0, %s146
      %p148 = pneg %p35
      %p149 = pneg %p32
      %p150 = pneg %p56
      %p151 = pneg %p53
      %p152 = pneg %p77
      %p153 = pneg %p74
      %p154 = pneg %p103
      %p155 = pneg %p100
      %p156 = scmp.lt.s32.totalorder %s14, 1
      %s157 = scalar_select %p156, %s14, 1
      %s158 = smul.addr %s157, 32
      %s159 = smul.addr %s158, 8
      %s160 = scalar_lea.vmem %s3, %s159
      %p161 = scmp.lt.s32.totalorder %s14, 1
      %s162 = scalar_select %p161, %s14, 1
      %s163 = smul.addr %s162, 32
      %s164 = smul.addr %s163, 4
      %s165 = scalar_lea.vmem %s0, %s164
      %p166 = scmp.lt.s32.totalorder %s14, 1
      %s167 = scalar_select %p166, %s14, 1
      %s168 = smul.addr %s167, 32
      %s169 = smul.addr %s168, 8
      %s170 = scalar_lea.vmem %s3, %s169
      %v171 = vld [vmem:[%s165] sm:$0xf]
      %v172 = vld [vmem:[%s165 + $0x4] sm:$0xf]
      %v173 = vld [vmem:[%s165 + $0x8] sm:$0xf]
      %v174 = vld [vmem:[%s165 + $0xc] sm:$0xf]
      %v175 = vld [vmem:[%s165 + $0x10] sm:$0xf]
      %v176 = vld [vmem:[%s165 + $0x14] sm:$0xf]
      %v177 = vld [vmem:[%s165 + $0x18] sm:$0xf]
      %v178 = vld [vmem:[%s165 + $0x1c] sm:$0xf]
      %v179 = vld [vmem:[%s165 + $0x20] sm:$0xf]
      %v180 = vld [vmem:[%s165 + $0x24] sm:$0xf]
      %v181 = vld [vmem:[%s165 + $0x28] sm:$0xf]
      %v182 = vld [vmem:[%s165 + $0x2c] sm:$0xf]
      %v183 = vld [vmem:[%s165 + $0x30] sm:$0xf]
      %v184 = vld [vmem:[%s165 + $0x34] sm:$0xf]
      %v185 = vld [vmem:[%s165 + $0x38] sm:$0xf]
      %v186 = vld [vmem:[%s165 + $0x3c] sm:$0xf]
      %v187 = vld [vmem:[%s165 + $0x40] sm:$0xf]
      %v188 = vld [vmem:[%s165 + $0x44] sm:$0xf]
      %v189 = vld [vmem:[%s165 + $0x48] sm:$0xf]
      %v190 = vld [vmem:[%s165 + $0x4c] sm:$0xf]
      %v191 = vld [vmem:[%s165 + $0x50] sm:$0xf]
      %v192 = vld [vmem:[%s165 + $0x54] sm:$0xf]
      %v193 = vld [vmem:[%s165 + $0x58] sm:$0xf]
      %v194 = vld [vmem:[%s165 + $0x5c] sm:$0xf]
      %v195 = vld [vmem:[%s165 + $0x60] sm:$0xf]
      %v196 = vld [vmem:[%s165 + $0x64] sm:$0xf]
      %v197 = vld [vmem:[%s165 + $0x68] sm:$0xf]
      %v198 = vld [vmem:[%s165 + $0x6c] sm:$0xf]
      %v199 = vld [vmem:[%s165 + $0x70] sm:$0xf]
      %v200 = vld [vmem:[%s165 + $0x74] sm:$0xf]
      %v201 = vld [vmem:[%s165 + $0x78] sm:$0xf]
      %v202 = vld [vmem:[%s165 + $0x7c] sm:$0xf]
      %v203 = vunpack.c.l.bf16 %v171
      %v204 = vunpack.c.l.bf16 %v172
      %v205 = vunpack.c.l.bf16 %v173
      %v206 = vunpack.c.l.bf16 %v174
      %v207 = vunpack.c.l.bf16 %v175
      %v208 = vunpack.c.l.bf16 %v176
      %v209 = vunpack.c.l.bf16 %v177
      %v210 = vunpack.c.l.bf16 %v178
      %v211 = vunpack.c.l.bf16 %v179
      %v212 = vunpack.c.l.bf16 %v180
      %v213 = vunpack.c.l.bf16 %v181
      %v214 = vunpack.c.l.bf16 %v182
      %v215 = vunpack.c.l.bf16 %v183
      %v216 = vunpack.c.l.bf16 %v184
      %v217 = vunpack.c.l.bf16 %v185
      %v218 = vunpack.c.l.bf16 %v186
      %v219 = vunpack.c.l.bf16 %v187
      %v220 = vunpack.c.l.bf16 %v188
      %v221 = vunpack.c.l.bf16 %v189
      %v222 = vunpack.c.l.bf16 %v190
      %v223 = vunpack.c.l.bf16 %v191
      %v224 = vunpack.c.l.bf16 %v192
      %v225 = vunpack.c.l.bf16 %v193
      %v226 = vunpack.c.l.bf16 %v194
      %v227 = vunpack.c.l.bf16 %v195
      %v228 = vunpack.c.l.bf16 %v196
      %v229 = vunpack.c.l.bf16 %v197
      %v230 = vunpack.c.l.bf16 %v198
      %v231 = vunpack.c.l.bf16 %v199
      %v232 = vunpack.c.l.bf16 %v200
      %v233 = vunpack.c.l.bf16 %v201
      %v234 = vunpack.c.l.bf16 %v202
      %v235 = vld [vmem:[%s1] sm:$0x1]
      %v236 = vld [vmem:[%s2] sm:$0x1]
      %v238 = vlaneseq
      %v239 = vshrl.u32 %v238, 7
      %v240 = vsub.s32 0, %v239
      %v241 = vrot.slane %v235, %v240
      %v243 = vmul.f32 %v203, %v241
      %v244 = vmul.f32 %v204, %v241
      %v245 = vmul.f32 %v205, %v241
      %v246 = vmul.f32 %v206, %v241
      %v247 = vmul.f32 %v207, %v241
      %v248 = vmul.f32 %v208, %v241
      %v249 = vmul.f32 %v209, %v241
      %v250 = vmul.f32 %v210, %v241
      %v251 = vmul.f32 %v211, %v241
      %v252 = vmul.f32 %v212, %v241
      %v253 = vmul.f32 %v213, %v241
      %v254 = vmul.f32 %v214, %v241
      %v255 = vmul.f32 %v215, %v241
      %v256 = vmul.f32 %v216, %v241
      %v257 = vmul.f32 %v217, %v241
      %v258 = vmul.f32 %v218, %v241
      %v259 = vmul.f32 %v219, %v241
      %v260 = vmul.f32 %v220, %v241
      %v261 = vmul.f32 %v221, %v241
      %v262 = vmul.f32 %v222, %v241
      %v263 = vmul.f32 %v223, %v241
      %v264 = vmul.f32 %v224, %v241
      %v265 = vmul.f32 %v225, %v241
      %v266 = vmul.f32 %v226, %v241
      %v267 = vmul.f32 %v227, %v241
      %v268 = vmul.f32 %v228, %v241
      %v269 = vmul.f32 %v229, %v241
      %v270 = vmul.f32 %v230, %v241
      %v271 = vmul.f32 %v231, %v241
      %v272 = vmul.f32 %v232, %v241
      %v273 = vmul.f32 %v233, %v241
      %v274 = vmul.f32 %v234, %v241
      %v276 = vlaneseq
      %v277 = vshrl.u32 %v276, 7
      %v278 = vsub.s32 0, %v277
      %v279 = vrot.slane %v236, %v278
      %v281 = vadd.f32 %v243, %v279
      %v282 = vadd.f32 %v244, %v279
      %v283 = vadd.f32 %v245, %v279
      %v284 = vadd.f32 %v246, %v279
      %v285 = vadd.f32 %v247, %v279
      %v286 = vadd.f32 %v248, %v279
      %v287 = vadd.f32 %v249, %v279
      %v288 = vadd.f32 %v250, %v279
      %v289 = vadd.f32 %v251, %v279
      %v290 = vadd.f32 %v252, %v279
      %v291 = vadd.f32 %v253, %v279
      %v292 = vadd.f32 %v254, %v279
      %v293 = vadd.f32 %v255, %v279
      %v294 = vadd.f32 %v256, %v279
      %v295 = vadd.f32 %v257, %v279
      %v296 = vadd.f32 %v258, %v279
      %v297 = vadd.f32 %v259, %v279
      %v298 = vadd.f32 %v260, %v279
      %v299 = vadd.f32 %v261, %v279
      %v300 = vadd.f32 %v262, %v279
      %v301 = vadd.f32 %v263, %v279
      %v302 = vadd.f32 %v264, %v279
      %v303 = vadd.f32 %v265, %v279
      %v304 = vadd.f32 %v266, %v279
      %v305 = vadd.f32 %v267, %v279
      %v306 = vadd.f32 %v268, %v279
      %v307 = vadd.f32 %v269, %v279
      %v308 = vadd.f32 %v270, %v279
      %v309 = vadd.f32 %v271, %v279
      %v310 = vadd.f32 %v272, %v279
      %v311 = vadd.f32 %v273, %v279
      %v312 = vadd.f32 %v274, %v279
      %v313 = vmax.f32 %v281, 0.0
      %v314 = vmax.f32 %v282, 0.0
      %v315 = vmax.f32 %v283, 0.0
      %v316 = vmax.f32 %v284, 0.0
      %v317 = vmax.f32 %v285, 0.0
      %v318 = vmax.f32 %v286, 0.0
      %v319 = vmax.f32 %v287, 0.0
      %v320 = vmax.f32 %v288, 0.0
      %v321 = vmax.f32 %v289, 0.0
      %v322 = vmax.f32 %v290, 0.0
      %v323 = vmax.f32 %v291, 0.0
      %v324 = vmax.f32 %v292, 0.0
      %v325 = vmax.f32 %v293, 0.0
      %v326 = vmax.f32 %v294, 0.0
      %v327 = vmax.f32 %v295, 0.0
      %v328 = vmax.f32 %v296, 0.0
      %v329 = vmax.f32 %v297, 0.0
      %v330 = vmax.f32 %v298, 0.0
      %v331 = vmax.f32 %v299, 0.0
      %v332 = vmax.f32 %v300, 0.0
      %v333 = vmax.f32 %v301, 0.0
      %v334 = vmax.f32 %v302, 0.0
      %v335 = vmax.f32 %v303, 0.0
      %v336 = vmax.f32 %v304, 0.0
      %v337 = vmax.f32 %v305, 0.0
      %v338 = vmax.f32 %v306, 0.0
      %v339 = vmax.f32 %v307, 0.0
      %v340 = vmax.f32 %v308, 0.0
      %v341 = vmax.f32 %v309, 0.0
      %v342 = vmax.f32 %v310, 0.0
      %v343 = vmax.f32 %v311, 0.0
      %v344 = vmax.f32 %v312, 0.0
      %345 = vst [vmem:[%s170] sm:$0xff] %v313
      %346 = vst [vmem:[%s170 + $0x8] sm:$0xff] %v314
      %347 = vst [vmem:[%s170 + $0x10] sm:$0xff] %v315
      %348 = vst [vmem:[%s170 + $0x18] sm:$0xff] %v316
      %349 = vst [vmem:[%s170 + $0x20] sm:$0xff] %v317
      %350 = vst [vmem:[%s170 + $0x28] sm:$0xff] %v318
      %351 = vst [vmem:[%s170 + $0x30] sm:$0xff] %v319
      %352 = vst [vmem:[%s170 + $0x38] sm:$0xff] %v320
      %353 = vst [vmem:[%s170 + $0x40] sm:$0xff] %v321
      %354 = vst [vmem:[%s170 + $0x48] sm:$0xff] %v322
      %355 = vst [vmem:[%s170 + $0x50] sm:$0xff] %v323
      %356 = vst [vmem:[%s170 + $0x58] sm:$0xff] %v324
      %357 = vst [vmem:[%s170 + $0x60] sm:$0xff] %v325
      %358 = vst [vmem:[%s170 + $0x68] sm:$0xff] %v326
      %359 = vst [vmem:[%s170 + $0x70] sm:$0xff] %v327
      %360 = vst [vmem:[%s170 + $0x78] sm:$0xff] %v328
      %361 = vst [vmem:[%s170 + $0x80] sm:$0xff] %v329
      %362 = vst [vmem:[%s170 + $0x88] sm:$0xff] %v330
      %363 = vst [vmem:[%s170 + $0x90] sm:$0xff] %v331
      %364 = vst [vmem:[%s170 + $0x98] sm:$0xff] %v332
      %365 = vst [vmem:[%s170 + $0xa0] sm:$0xff] %v333
      %366 = vst [vmem:[%s170 + $0xa8] sm:$0xff] %v334
      %367 = vst [vmem:[%s170 + $0xb0] sm:$0xff] %v335
      %368 = vst [vmem:[%s170 + $0xb8] sm:$0xff] %v336
      %369 = vst [vmem:[%s170 + $0xc0] sm:$0xff] %v337
      %370 = vst [vmem:[%s170 + $0xc8] sm:$0xff] %v338
      %371 = vst [vmem:[%s170 + $0xd0] sm:$0xff] %v339
      %372 = vst [vmem:[%s170 + $0xd8] sm:$0xff] %v340
      %373 = vst [vmem:[%s170 + $0xe0] sm:$0xff] %v341
      %374 = vst [vmem:[%s170 + $0xe8] sm:$0xff] %v342
      %375 = vst [vmem:[%s170 + $0xf0] sm:$0xff] %v343
      %376 = vst [vmem:[%s170 + $0xf8] sm:$0xff] %v344
      %p377 = scmp.lt.s32.totalorder %s14, 1
      %s378 = scalar_select %p377, %s14, 1
      %s379 = smul.addr %s378, 32
      %s380 = smul.addr %s379, 8
      %s381 = scalar_lea.vmem %s3, %s380
      // Predicated region
      $region33: #{double_conv.5} parent=31 // pred_check
        %p382 = pneg %p100
      $region34: #{double_conv.5} parent=31 // pred_check_branch
        %384 = sbr.rel (%p382) target = $region36
      $region35: #{double_conv.5} parent=31 // pred_region
        _
      $region36: #{double_conv.5} parent=31 // pred_fallthru
        _
    $region32: #{double_conv.5} parent=5 // pred_fallthru
      _
    %p385 = scmp.le.s32.totalorder 2, %s9
    // Predicated region
    $region37: #{double_conv.5} parent=5 // pred_check
      %p386 = pneg %p385
    $region38: #{double_conv.5} parent=5 // pred_check_branch
      %388 = sbr.rel (%p386) target = $region40
    $region39: #{double_conv.5} parent=5 // pred_region
      %s389 = ssub.s32 %s9, 2
      // Predicated region
      $region41: #{double_conv.5} parent=39 // pred_check
        %p390 = pneg %p106
      $region42: #{double_conv.5} parent=39 // pred_check_branch
        %392 = sbr.rel (%p390) target = $region44
      $region43: #{double_conv.5} parent=39 // pred_region
        %p393 = scmp.lt.s32.totalorder %s15, 1
        %s394 = scalar_select %p393, %s15, 1
        %s395 = smul.addr %s394, 32
        %s396 = smul.addr %s395, 8
        %s397 = scalar_lea.vmem %s3, %s396
      $region44: #{double_conv.5} parent=39 // pred_fallthru
        _
    $region40: #{double_conv.5} parent=5 // pred_fallthru
      _
  $region6: #{double_conv.5} parent=0 // loop_footer
    %s13 = sadd.s32 1, %s9
  $region7: #{double_conv.5} parent=0 // loop_footer_branch
    %8 = sbr.rel target = $region3
  $region8: #{double_conv.5} parent=0 // loop_exit
    _

// kernel: double_conv.4
$region0: #{double_conv.4}
  #allocation0 [shape = 'u32[]', space=smem, size = 0x4, offset = 0x4, fixed_abs, tag = 'smem constant byte address 0x4 - core index']
  #allocation1 [shape = 'u32[144,128]{1,0:T(1,128)}', space=vmem, size = 0x12000, scoped, tag = 'internal scratch']
  %s0 = inlined_call_operand.vmem [shape: bf16[2,16,18,24], index: 0, kind: input, shape index: {}]
  %s1 = inlined_call_operand.vmem [shape: bf16[72,128], index: 1, kind: input, shape index: {}]
  %s2 = inlined_call_operand.vmem [shape: bf16[2,256,128], index: 2, kind: output, shape index: {0}]
  %s3 = inlined_call_operand.vmem [shape: f32[2,1,128], index: 3, kind: output, shape index: {1}]
  %s4 = inlined_call_operand.vmem [shape: f32[2,1,128], index: 4, kind: output, shape index: {2}]
  %5 = xla_tuple %s2, %s3, %s4
  %s6 = sld [smem:[#allocation0]]
  $region57: #{double_conv.4} parent=0
    _
  %s8 = ssub.s32 1, %s6
  %s9 = scalar_select 0, %s8, %s6
  loop: start=0, step=1, limit=4
  $region2: #{double_conv.4} parent=0 // loop_pre_header
    _
  $region3: #{double_conv.4} parent=0 // loop_header
    %s11 = sphi 0, %s15
    %p12 = scmp.ge.s32.totalorder %s11, 4
    %s18 = sphi 0, %s30
    %s19 = sphi 0, %s26
    %s20 = sphi 0, %s18
    %s21 = sphi 0, %s19
    %s22 = sphi 0, %s20
    %s23 = sphi 0, %s21
    %s35 = sphi 0, %s37
    %s38 = sphi 0, %s35
    %s39 = sphi 0, %s38
    %s55 = sphi 0, %s39
    %s59 = sphi 0, %s59
    %s61 = sphi 0, %s59
    %s62 = sphi 0, %s61
    %s76 = sphi 0, %s62
    %s84 = sphi 0, %s86
    %s87 = sphi 0, %s84
    %s88 = sphi 0, %s87
    %s104 = sphi 0, %s88
    %s112 = sphi 0, %s114
    %s115 = sphi 0, %s112
    %s116 = sphi 0, %s115
    %s132 = sphi 0, %s116
    %s140 = sphi 0, %s142
    %s143 = sphi 0, %s140
    %s144 = sphi 0, %s143
    %s160 = sphi 0, %s144
  $region4: #{double_conv.4} parent=0 // loop_header_branch
    %14 = sbr.rel (%p12) target = $region8
  $region5: #{double_conv.4} parent=0 // loop_body
    %s16 = ssub.s32 %s11, 1
    %s17 = ssub.s32 %s11, 2
    %s24 = sadd.s32 1, %s19
    %p25 = scmp.ge.s32.totalorder %s24, 1
    %s26 = scalar_select %p25, 0, %s24
    %s27 = sadd.s32 1, %s18
    %s28 = scalar_select %p25, %s27, %s18
    %p29 = scmp.ge.s32.totalorder %s28, 2
    %s30 = scalar_select %p29, 0, %s28
    %s31 = ssub.s32 %s18, %s30
    %s32 = ssub.s32 %s19, %s26
    %s33 = sor.u32 %s31, %s32
    %p34 = scmp.eq.s32.totalorder %s33, 0
    %s36 = sadd.s32 %s35, 1
    %s37 = scalar_select %p34, %s35, %s36
    %p40 = pneg %p34
    %p41 = scmp.eq.s32.totalorder %s11, 1
    %p42 = por %p40, %p41
    %p43 = scmp.ne.s32.totalorder %s35, %s38
    %p44 = scmp.eq.s32.totalorder %s11, 0
    %p45 = por %p43, %p44
    %p46 = scmp.ne.s32.totalorder %s35, %s38
    %p47 = scmp.eq.s32.totalorder %s16, 1
    %p48 = por %p46, %p47
    %p49 = scmp.ne.s32.totalorder %s38, %s39
    %p50 = scmp.eq.s32.totalorder %s16, 0
    %p51 = por %p49, %p50
    %p52 = scmp.ne.s32.totalorder %s38, %s39
    %p53 = scmp.eq.s32.totalorder %s17, 1
    %p54 = por %p52, %p53
    %p56 = scmp.ne.s32.totalorder %s39, %s55
    %p57 = scmp.eq.s32.totalorder %s17, 0
    %p58 = por %p56, %p57
    %s60 = sadd.s32 %s59, 1
    %p63 = scmp.eq.s32.totalorder %s11, 1
    %p64 = scmp.ne.s32.totalorder %s59, %s61
    %p65 = scmp.eq.s32.totalorder %s11, 0
    %p66 = por %p64, %p65
    %p67 = scmp.ne.s32.totalorder %s59, %s61
    %p68 = scmp.eq.s32.totalorder %s16, 1
    %p69 = por %p67, %p68
    %p70 = scmp.ne.s32.totalorder %s61, %s62
    %p71 = scmp.eq.s32.totalorder %s16, 0
    %p72 = por %p70, %p71
    %p73 = scmp.ne.s32.totalorder %s61, %s62
    %p74 = scmp.eq.s32.totalorder %s17, 1
    %p75 = por %p73, %p74
    %p77 = scmp.ne.s32.totalorder %s62, %s76
    %p78 = scmp.eq.s32.totalorder %s17, 0
    %p79 = por %p77, %p78
    %s80 = sadd.s32 %s18, %s19
    %s81 = sadd.s32 %s30, %s26
    %s82 = ssub.s32 %s80, %s81
    %p83 = scmp.eq.s32.totalorder %s82, 0
    %s85 = sadd.s32 %s84, 1
    %s86 = scalar_select %p83, %s84, %s85
    %p89 = pneg %p83
    %p90 = scmp.eq.s32.totalorder %s11, 1
    %p91 = por %p89, %p90
    %p92 = scmp.ne.s32.totalorder %s84, %s87
    %p93 = scmp.eq.s32.totalorder %s11, 0
    %p94 = por %p92, %p93
    %p95 = scmp.ne.s32.totalorder %s84, %s87
    %p96 = scmp.eq.s32.totalorder %s16, 1
    %p97 = por %p95, %p96
    %p98 = scmp.ne.s32.totalorder %s87, %s88
    %p99 = scmp.eq.s32.totalorder %s16, 0
    %p100 = por %p98, %p99
    %p101 = scmp.ne.s32.totalorder %s87, %s88
    %p102 = scmp.eq.s32.totalorder %s17, 1
    %p103 = por %p101, %p102
    %p105 = scmp.ne.s32.totalorder %s88, %s104
    %p106 = scmp.eq.s32.totalorder %s17, 0
    %p107 = por %p105, %p106
    %s108 = sadd.s32 %s18, %s19
    %s109 = sadd.s32 %s30, %s26
    %s110 = ssub.s32 %s108, %s109
    %p111 = scmp.eq.s32.totalorder %s110, 0
    %s113 = sadd.s32 %s112, 1
    %s114 = scalar_select %p111, %s112, %s113
    %p117 = pneg %p111
    %p118 = scmp.eq.s32.totalorder %s11, 1
    %p119 = por %p117, %p118
    %p120 = scmp.ne.s32.totalorder %s112, %s115
    %p121 = scmp.eq.s32.totalorder %s11, 0
    %p122 = por %p120, %p121
    %p123 = scmp.ne.s32.totalorder %s112, %s115
    %p124 = scmp.eq.s32.totalorder %s16, 1
    %p125 = por %p123, %p124
    %p126 = scmp.ne.s32.totalorder %s115, %s116
    %p127 = scmp.eq.s32.totalorder %s16, 0
    %p128 = por %p126, %p127
    %p129 = scmp.ne.s32.totalorder %s115, %s116
    %p130 = scmp.eq.s32.totalorder %s17, 1
    %p131 = por %p129, %p130
    %p133 = scmp.ne.s32.totalorder %s116, %s132
    %p134 = scmp.eq.s32.totalorder %s17, 0
    %p135 = por %p133, %p134
    %s136 = sadd.s32 %s18, %s19
    %s137 = sadd.s32 %s30, %s26
    %s138 = ssub.s32 %s136, %s137
    %p139 = scmp.eq.s32.totalorder %s138, 0
    %s141 = sadd.s32 %s140, 1
    %s142 = scalar_select %p139, %s140, %s141
    %p145 = pneg %p139
    %p146 = scmp.eq.s32.totalorder %s11, 1
    %p147 = por %p145, %p146
    %p148 = scmp.ne.s32.totalorder %s140, %s143
    %p149 = scmp.eq.s32.totalorder %s11, 0
    %p150 = por %p148, %p149
    %p151 = scmp.ne.s32.totalorder %s140, %s143
    %p152 = scmp.eq.s32.totalorder %s16, 1
    %p153 = por %p151, %p152
    %p154 = scmp.ne.s32.totalorder %s143, %s144
    %p155 = scmp.eq.s32.totalorder %s16, 0
    %p156 = por %p154, %p155
    %p157 = scmp.ne.s32.totalorder %s143, %s144
    %p158 = scmp.eq.s32.totalorder %s17, 1
    %p159 = por %p157, %p158
    %p161 = scmp.ne.s32.totalorder %s144, %s160
    %p162 = scmp.eq.s32.totalorder %s17, 0
    %p163 = por %p161, %p162
    %p164 = scmp.le.s32.totalorder 1, %s11
    %p165 = scmp.lt.s32.totalorder %s11, 3
    %p166 = pnand %p164, %p165
    %p167 = pneg %p166
    // Predicated region
    $region9: #{double_conv.4} parent=5 // pred_check
      _
    $region10: #{double_conv.4} parent=5 // pred_check_branch
      %169 = sbr.rel (%p166) target = $region12
    $region11: #{double_conv.4} parent=5 // pred_region
      %s170 = ssub.s32 %s11, 1
      // Predicated region
      $region13: #{double_conv.4} parent=11 // pred_check
        %p171 = pneg %p72
      $region14: #{double_conv.4} parent=11 // pred_check_branch
        %173 = sbr.rel (%p171) target = $region16
      $region15: #{double_conv.4} parent=11 // pred_region
        _
      $region16: #{double_conv.4} parent=11 // pred_fallthru
        _
    $region12: #{double_conv.4} parent=5 // pred_fallthru
      _
    %p174 = scmp.lt.s32.totalorder %s11, 2
    // Predicated region
    $region17: #{double_conv.4} parent=5 // pred_check
      %p175 = pneg %p174
    $region18: #{double_conv.4} parent=5 // pred_check_branch
      %177 = sbr.rel (%p175) target = $region20
    $region19: #{double_conv.4} parent=5 // pred_region
      // Predicated region
      $region21: #{double_conv.4} parent=19 // pred_check
        %p178 = pneg %p45
      $region22: #{double_conv.4} parent=19 // pred_check_branch
        %180 = sbr.rel (%p178) target = $region24
      $region23: #{double_conv.4} parent=19 // pred_region
        %s181 = smul.u32 16, %s19
        %p182 = scmp.lt.s32.totalorder %s18, 1
        %s183 = scalar_select %p182, %s18, 1
        %p184 = scmp.lt.s32.totalorder %s181, 15
        %s185 = scalar_select %p184, %s181, 15
        %s186 = smul.addr %s185, 3
        %s187 = smul.addr %s183, 48
        %s188 = sadd.s32 %s186, %s187
        %s189 = smul.addr %s188, 4
        %s190 = scalar_lea.vmem %s0, %s189
        %s191 = smul.u32 16, %s19
      $region24: #{double_conv.4} parent=19 // pred_fallthru
        _
    $region20: #{double_conv.4} parent=5 // pred_fallthru
      _
    %p192 = scmp.le.s32.totalorder 1, %s11
    %p193 = scmp.lt.s32.totalorder %s11, 3
    %p194 = pnand %p192, %p193
    %p195 = pneg %p194
    // Predicated region
    $region25: #{double_conv.4} parent=5 // pred_check
      _
    $region26: #{double_conv.4} parent=5 // pred_check_branch
      %197 = sbr.rel (%p194) target = $region28
    $region27: #{double_conv.4} parent=5 // pred_region
      %s198 = ssub.s32 %s11, 1
      %s199 = smul.u32 16, %s21
      %p200 = scmp.lt.s32.totalorder %s20, 1
      %s201 = scalar_select %p200, %s20, 1
      %p202 = scmp.lt.s32.totalorder %s199, 15
      %s203 = scalar_select %p202, %s199, 15
      %s204 = smul.addr %s203, 3
      %s205 = smul.addr %s201, 48
      %s206 = sadd.s32 %s204, %s205
      %s207 = smul.addr %s206, 4
      %s208 = scalar_lea.vmem %s0, %s207
      %p209 = pneg %p51
      %p210 = pneg %p48
      %p211 = pneg %p72
      %p212 = pneg %p69
      %p213 = pneg %p100
      %p214 = pneg %p97
      %s215 = sadd.s32 %s20, %s21
      %p216 = scmp.lt.s32.totalorder %s215, 1
      %s217 = scalar_select %p216, %s215, 1
      %s218 = smul.addr %s217, 32
      %s219 = smul.addr %s218, 4
      %s220 = scalar_lea.vmem %s2, %s219
      %p221 = pneg %p128
      %p222 = pneg %p125
      %s223 = sadd.s32 %s20, %s21
      %p224 = scmp.lt.s32.totalorder %s223, 1
      %s225 = scalar_select %p224, %s223, 1
      %s226 = scalar_lea.vmem %s3, %s225
      %p227 = pneg %p156
      %p228 = pneg %p153
      %s229 = sadd.s32 %s20, %s21
      %p230 = scmp.lt.s32.totalorder %s229, 1
      %s231 = scalar_select %p230, %s229, 1
      %s232 = scalar_lea.vmem %s4, %s231
      %s233 = smul.u32 16, %s21
      %p234 = scmp.lt.s32.totalorder %s20, 1
      %s235 = scalar_select %p234, %s20, 1
      %p236 = scmp.lt.s32.totalorder %s233, 15
      %s237 = scalar_select %p236, %s233, 15
      %s238 = smul.addr %s237, 3
      %s239 = smul.addr %s235, 48
      %s240 = sadd.s32 %s238, %s239
      %s241 = smul.addr %s240, 4
      %s242 = scalar_lea.vmem %s0, %s241
      %s243 = smul.u32 16, %s21
      %s244 = sadd.s32 %s20, %s21
      %p245 = scmp.lt.s32.totalorder %s244, 1
      %s246 = scalar_select %p245, %s244, 1
      %s247 = smul.addr %s246, 32
      %s248 = smul.addr %s247, 4
      %s249 = scalar_lea.vmem %s2, %s248
      %s250 = sadd.s32 %s20, %s21
      %s251 = sadd.s32 %s20, %s21
      %p252 = scmp.lt.s32.totalorder %s251, 1
      %s253 = scalar_select %p252, %s251, 1
      %s254 = scalar_lea.vmem %s3, %s253
      %s255 = sadd.s32 %s20, %s21
      %s256 = sadd.s32 %s20, %s21
      %p257 = scmp.lt.s32.totalorder %s256, 1
      %s258 = scalar_select %p257, %s256, 1
      %s259 = scalar_lea.vmem %s4, %s258
      %s260 = sadd.s32 %s20, %s21
      %v262 = vld [vmem:[%s242] sm:$0xf]
      %v263 = vld [vmem:[%s242 + $0x4] sm:$0xf]
      %v264 = vld [vmem:[%s242 + $0x8] sm:$0x1]
      %v265 = vld [vmem:[%s242 + $0xc] sm:$0xf]
      %v266 = vld [vmem:[%s242 + $0x10] sm:$0xf]
      %v267 = vld [vmem:[%s242 + $0x14] sm:$0x1]
      %v268 = vld [vmem:[%s242 + $0x18] sm:$0xf]
      %v269 = vld [vmem:[%s242 + $0x1c] sm:$0xf]
      %v270 = vld [vmem:[%s242 + $0x20] sm:$0x1]
      %v271 = vld [vmem:[%s242 + $0x24] sm:$0xf]
      %v272 = vld [vmem:[%s242 + $0x28] sm:$0xf]
      %v273 = vld [vmem:[%s242 + $0x2c] sm:$0x1]
      %v274 = vld [vmem:[%s242 + $0x30] sm:$0xf]
      %v275 = vld [vmem:[%s242 + $0x34] sm:$0xf]
      %v276 = vld [vmem:[%s242 + $0x38] sm:$0x1]
      %v277 = vld [vmem:[%s242 + $0x3c] sm:$0xf]
      %v278 = vld [vmem:[%s242 + $0x40] sm:$0xf]
      %v279 = vld [vmem:[%s242 + $0x44] sm:$0x1]
      %v280 = vld [vmem:[%s242 + $0x48] sm:$0xf]
      %v281 = vld [vmem:[%s242 + $0x4c] sm:$0xf]
      %v282 = vld [vmem:[%s242 + $0x50] sm:$0x1]
      %v283 = vld [vmem:[%s242 + $0x54] sm:$0xf]
      %v284 = vld [vmem:[%s242 + $0x58] sm:$0xf]
      %v285 = vld [vmem:[%s242 + $0x5c] sm:$0x1]
      %v286 = vld [vmem:[%s242 + $0x60] sm:$0xf]
      %v287 = vld [vmem:[%s242 + $0x64] sm:$0xf]
      %v288 = vld [vmem:[%s242 + $0x68] sm:$0x1]
      %v289 = vld [vmem:[%s242 + $0x6c] sm:$0xf]
      %v290 = vld [vmem:[%s242 + $0x70] sm:$0xf]
      %v291 = vld [vmem:[%s242 + $0x74] sm:$0x1]
      %v292 = vld [vmem:[%s242 + $0x78] sm:$0xf]
      %v293 = vld [vmem:[%s242 + $0x7c] sm:$0xf]
      %v294 = vld [vmem:[%s242 + $0x80] sm:$0x1]
      %v295 = vld [vmem:[%s242 + $0x84] sm:$0xf]
      %v296 = vld [vmem:[%s242 + $0x88] sm:$0xf]
      %v297 = vld [vmem:[%s242 + $0x8c] sm:$0x1]
      %v298 = vld [vmem:[%s242 + $0x90] sm:$0xf]
      %v299 = vld [vmem:[%s242 + $0x94] sm:$0xf]
      %v300 = vld [vmem:[%s242 + $0x98] sm:$0x1]
      %v301 = vld [vmem:[%s242 + $0x9c] sm:$0xf]
      %v302 = vld [vmem:[%s242 + $0xa0] sm:$0xf]
      %v303 = vld [vmem:[%s242 + $0xa4] sm:$0x1]
      %v304 = vld [vmem:[%s242 + $0xa8] sm:$0xf]
      %v305 = vld [vmem:[%s242 + $0xac] sm:$0xf]
      %v306 = vld [vmem:[%s242 + $0xb0] sm:$0x1]
      %v307 = vld [vmem:[%s242 + $0xb4] sm:$0xf]
      %v308 = vld [vmem:[%s242 + $0xb8] sm:$0xf]
      %v309 = vld [vmem:[%s242 + $0xbc] sm:$0x1]
      %v342 = vunpack.c.l.b16 %v262
      %v343 = vunpack.c.l.b16 %v263
      %v344 = vunpack.c.l.b16 %v265
      %v345 = vunpack.c.l.b16 %v266
      %v346 = vunpack.c.l.b16 %v268
      %v347 = vunpack.c.l.b16 %v269
      %v348 = vunpack.c.l.b16 %v271
      %v349 = vunpack.c.l.b16 %v272
      %v350 = vunpack.c.l.b16 %v274
      %v351 = vunpack.c.l.b16 %v275
      %v352 = vunpack.c.l.b16 %v277
      %v353 = vunpack.c.l.b16 %v278
      %v354 = vunpack.c.l.b16 %v280
      %v355 = vunpack.c.l.b16 %v281
      %v356 = vunpack.c.l.b16 %v283
      %v357 = vunpack.c.l.b16 %v284
      %v358 = vunpack.c.l.b16 %v286
      %v359 = vunpack.c.l.b16 %v287
      %v360 = vunpack.c.l.b16 %v289
      %v361 = vunpack.c.l.b16 %v290
      %v362 = vunpack.c.l.b16 %v292
      %v363 = vunpack.c.l.b16 %v293
      %v364 = vunpack.c.l.b16 %v295
      %v365 = vunpack.c.l.b16 %v296
      %v366 = vunpack.c.l.b16 %v298
      %v367 = vunpack.c.l.b16 %v299
      %v368 = vunpack.c.l.b16 %v301
      %v369 = vunpack.c.l.b16 %v302
      %v370 = vunpack.c.l.b16 %v304
      %v371 = vunpack.c.l.b16 %v305
      %v372 = vunpack.c.l.b16 %v307
      %v373 = vunpack.c.l.b16 %v308
      %v374 = vpack.c.b16 %v343, %v342
      %v375 = vpack.c.b16 %v345, %v344
      %v376 = vpack.c.b16 %v347, %v346
      %v377 = vpack.c.b16 %v349, %v348
      %v378 = vpack.c.b16 %v351, %v350
      %v379 = vpack.c.b16 %v353, %v352
      %v380 = vpack.c.b16 %v355, %v354
      %v381 = vpack.c.b16 %v357, %v356
      %v382 = vpack.c.b16 %v359, %v358
      %v383 = vpack.c.b16 %v361, %v360
      %v384 = vpack.c.b16 %v363, %v362
      %v385 = vpack.c.b16 %v365, %v364
      %v386 = vpack.c.b16 %v367, %v366
      %v387 = vpack.c.b16 %v369, %v368
      %v388 = vpack.c.b16 %v371, %v370
      %v389 = vpack.c.b16 %v373, %v372
      %v406 = vunpack.c.l.b16 %v264
      %v407 = vunpack.c.l.b16 %v267
      %v408 = vunpack.c.l.b16 %v270
      %v409 = vunpack.c.l.b16 %v273
      %v410 = vunpack.c.l.b16 %v276
      %v411 = vunpack.c.l.b16 %v279
      %v412 = vunpack.c.l.b16 %v282
      %v413 = vunpack.c.l.b16 %v285
      %v414 = vunpack.c.l.b16 %v288
      %v415 = vunpack.c.l.b16 %v291
      %v416 = vunpack.c.l.b16 %v294
      %v417 = vunpack.c.l.b16 %v297
      %v418 = vunpack.c.l.b16 %v300
      %v419 = vunpack.c.l.b16 %v303
      %v420 = vunpack.c.l.b16 %v306
      %v421 = vunpack.c.l.b16 %v309
      %v422 = vpack.c.b16 %v406, %v406
      %v423 = vpack.c.b16 %v407, %v407
      %v424 = vpack.c.b16 %v408, %v408
      %v425 = vpack.c.b16 %v409, %v409
      %v426 = vpack.c.b16 %v410, %v410
      %v427 = vpack.c.b16 %v411, %v411
      %v428 = vpack.c.b16 %v412, %v412
      %v429 = vpack.c.b16 %v413, %v413
      %v430 = vpack.c.b16 %v414, %v414
      %v431 = vpack.c.b16 %v415, %v415
      %v432 = vpack.c.b16 %v416, %v416
      %v433 = vpack.c.b16 %v417, %v417
      %v434 = vpack.c.b16 %v418, %v418
      %v435 = vpack.c.b16 %v419, %v419
      %v436 = vpack.c.b16 %v420, %v420
      %v437 = vpack.c.b16 %v421, %v421
      %vm438 = vsmask.f32 7424
      %v440 = vshrl.u32 %v374, 16
      %v442 = vshll.u32 %v374, 16
      %v444 = vrot.slane %v442, 1
      %v445 = vor.u32 %v440, %v444
      %v447 = vshll.u32 %v422, 16
      %v449 = vrot.slane %v447, 1
      %v450 = vsel %vm438, %v445, %v449
      %v452 = vshrl.u32 %v375, 16
      %v454 = vshll.u32 %v375, 16
      %v456 = vrot.slane %v454, 1
      %v457 = vor.u32 %v452, %v456
      %v459 = vshll.u32 %v423, 16
      %v461 = vrot.slane %v459, 1
      %v462 = vsel %vm438, %v457, %v461
      %v464 = vshrl.u32 %v376, 16
      %v466 = vshll.u32 %v376, 16
      %v468 = vrot.slane %v466, 1
      %v469 = vor.u32 %v464, %v468
      %v471 = vshll.u32 %v424, 16
      %v473 = vrot.slane %v471, 1
      %v474 = vsel %vm438, %v469, %v473
      %v476 = vshrl.u32 %v377, 16
      %v478 = vshll.u32 %v377, 16
      %v480 = vrot.slane %v478, 1
      %v481 = vor.u32 %v476, %v480
      %v483 = vshll.u32 %v425, 16
      %v485 = vrot.slane %v483, 1
      %v486 = vsel %vm438, %v481, %v485
      %v488 = vshrl.u32 %v378, 16
      %v490 = vshll.u32 %v378, 16
      %v492 = vrot.slane %v490, 1
      %v493 = vor.u32 %v488, %v492
      %v495 = vshll.u32 %v426, 16
      %v497 = vrot.slane %v495, 1
      %v498 = vsel %vm438, %v493, %v497
      %v500 = vshrl.u32 %v379, 16
      %v502 = vshll.u32 %v379, 16
      %v504 = vrot.slane %v502, 1
      %v505 = vor.u32 %v500, %v504
      %v507 = vshll.u32 %v427, 16
      %v509 = vrot.slane %v507, 1
      %v510 = vsel %vm438, %v505, %v509
      %v512 = vshrl.u32 %v380, 16
      %v514 = vshll.u32 %v380, 16
      %v516 = vrot.slane %v514, 1
      %v517 = vor.u32 %v512, %v516
      %v519 = vshll.u32 %v428, 16
      %v521 = vrot.slane %v519, 1
      %v522 = vsel %vm438, %v517, %v521
      %v524 = vshrl.u32 %v381, 16
      %v526 = vshll.u32 %v381, 16
      %v528 = vrot.slane %v526, 1
      %v529 = vor.u32 %v524, %v528
      %v531 = vshll.u32 %v429, 16
      %v533 = vrot.slane %v531, 1
      %v534 = vsel %vm438, %v529, %v533
      %v536 = vshrl.u32 %v382, 16
      %v538 = vshll.u32 %v382, 16
      %v540 = vrot.slane %v538, 1
      %v541 = vor.u32 %v536, %v540
      %v543 = vshll.u32 %v430, 16
      %v545 = vrot.slane %v543, 1
      %v546 = vsel %vm438, %v541, %v545
      %v548 = vshrl.u32 %v383, 16
      %v550 = vshll.u32 %v383, 16
      %v552 = vrot.slane %v550, 1
      %v553 = vor.u32 %v548, %v552
      %v555 = vshll.u32 %v431, 16
      %v557 = vrot.slane %v555, 1
      %v558 = vsel %vm438, %v553, %v557
      %v560 = vshrl.u32 %v384, 16
      %v562 = vshll.u32 %v384, 16
      %v564 = vrot.slane %v562, 1
      %v565 = vor.u32 %v560, %v564
      %v567 = vshll.u32 %v432, 16
      %v569 = vrot.slane %v567, 1
      %v570 = vsel %vm438, %v565, %v569
      %v572 = vshrl.u32 %v385, 16
      %v574 = vshll.u32 %v385, 16
      %v576 = vrot.slane %v574, 1
      %v577 = vor.u32 %v572, %v576
      %v579 = vshll.u32 %v433, 16
      %v581 = vrot.slane %v579, 1
      %v582 = vsel %vm438, %v577, %v581
      %v584 = vshrl.u32 %v386, 16
      %v586 = vshll.u32 %v386, 16
      %v588 = vrot.slane %v586, 1
      %v589 = vor.u32 %v584, %v588
      %v591 = vshll.u32 %v434, 16
      %v593 = vrot.slane %v591, 1
      %v594 = vsel %vm438, %v589, %v593
      %v596 = vshrl.u32 %v387, 16
      %v598 = vshll.u32 %v387, 16
      %v600 = vrot.slane %v598, 1
      %v601 = vor.u32 %v596, %v600
      %v603 = vshll.u32 %v435, 16
      %v605 = vrot.slane %v603, 1
      %v606 = vsel %vm438, %v601, %v605
      %v608 = vshrl.u32 %v388, 16
      %v610 = vshll.u32 %v388, 16
      %v612 = vrot.slane %v610, 1
      %v613 = vor.u32 %v608, %v612
      %v615 = vshll.u32 %v436, 16
      %v617 = vrot.slane %v615, 1
      %v618 = vsel %vm438, %v613, %v617
      %v620 = vshrl.u32 %v389, 16
      %v622 = vshll.u32 %v389, 16
      %v624 = vrot.slane %v622, 1
      %v625 = vor.u32 %v620, %v624
      %v627 = vshll.u32 %v437, 16
      %v629 = vrot.slane %v627, 1
      %v630 = vsel %vm438, %v625, %v629
      %631 = vrot.lane.b32.xlu0 %v450, 24
      %v632 = vpop.permute.xlu0 %631
      %633 = vrot.lane.b32.xlu0 %v462, 24
      %v634 = vpop.permute.xlu0 %633
      %635 = vrot.lane.b32.xlu0 %v474, 24
      %v636 = vpop.permute.xlu0 %635
      %637 = vrot.lane.b32.xlu0 %v486, 24
      %v638 = vpop.permute.xlu0 %637
      %639 = vrot.lane.b32.xlu0 %v498, 24
      %v640 = vpop.permute.xlu0 %639
      %641 = vrot.lane.b32.xlu0 %v510, 24
      %v642 = vpop.permute.xlu0 %641
      %643 = vrot.lane.b32.xlu0 %v522, 24
      %v644 = vpop.permute.xlu0 %643
      %645 = vrot.lane.b32.xlu0 %v534, 24
      %v646 = vpop.permute.xlu0 %645
      %647 = vrot.lane.b32.xlu0 %v546, 24
      %v648 = vpop.permute.xlu0 %647
      %649 = vrot.lane.b32.xlu0 %v558, 24
      %v650 = vpop.permute.xlu0 %649
      %651 = vrot.lane.b32.xlu0 %v570, 24
      %v652 = vpop.permute.xlu0 %651
      %653 = vrot.lane.b32.xlu0 %v582, 24
      %v654 = vpop.permute.xlu0 %653
      %655 = vrot.lane.b32.xlu0 %v594, 24
      %v656 = vpop.permute.xlu0 %655
      %657 = vrot.lane.b32.xlu0 %v606, 24
      %v658 = vpop.permute.xlu0 %657
      %659 = vrot.lane.b32.xlu0 %v618, 24
      %v660 = vpop.permute.xlu0 %659
      %661 = vrot.lane.b32.xlu0 %v630, 24
      %v662 = vpop.permute.xlu0 %661
      %vm663 = vcmask 1046528
      %v664 = vrot.slane %v374, 1
      %v665 = vrot.slane %v422, 1
      %v666 = vsel %vm663, %v664, %v665
      %v667 = vrot.slane %v375, 1
      %v668 = vrot.slane %v423, 1
      %v669 = vsel %vm663, %v667, %v668
      %v670 = vrot.slane %v376, 1
      %v671 = vrot.slane %v424, 1
      %v672 = vsel %vm663, %v670, %v671
      %v673 = vrot.slane %v377, 1
      %v674 = vrot.slane %v425, 1
      %v675 = vsel %vm663, %v673, %v674
      %v676 = vrot.slane %v378, 1
      %v677 = vrot.slane %v426, 1
      %v678 = vsel %vm663, %v676, %v677
      %v679 = vrot.slane %v379, 1
      %v680 = vrot.slane %v427, 1
      %v681 = vsel %vm663, %v679, %v680
      %v682 = vrot.slane %v380, 1
      %v683 = vrot.slane %v428, 1
      %v684 = vsel %vm663, %v682, %v683
      %v685 = vrot.slane %v381, 1
      %v686 = vrot.slane %v429, 1
      %v687 = vsel %vm663, %v685, %v686
      %v688 = vrot.slane %v382, 1
      %v689 = vrot.slane %v430, 1
      %v690 = vsel %vm663, %v688, %v689
      %v691 = vrot.slane %v383, 1
      %v692 = vrot.slane %v431, 1
      %v693 = vsel %vm663, %v691, %v692
      %v694 = vrot.slane %v384, 1
      %v695 = vrot.slane %v432, 1
      %v696 = vsel %vm663, %v694, %v695
      %v697 = vrot.slane %v385, 1
      %v698 = vrot.slane %v433, 1
      %v699 = vsel %vm663, %v697, %v698
      %v700 = vrot.slane %v386, 1
      %v701 = vrot.slane %v434, 1
      %v702 = vsel %vm663, %v700, %v701
      %v703 = vrot.slane %v387, 1
      %v704 = vrot.slane %v435, 1
      %v705 = vsel %vm663, %v703, %v704
      %v706 = vrot.slane %v388, 1
      %v707 = vrot.slane %v436, 1
      %v708 = vsel %vm663, %v706, %v707
      %v709 = vrot.slane %v389, 1
      %v710 = vrot.slane %v437, 1
      %v711 = vsel %vm663, %v709, %v710
      %712 = vrot.lane.b32.xlu0 %v666, 48
      %v713 = vpop.permute.xlu0 %712
      %714 = vrot.lane.b32.xlu0 %v669, 48
      %v715 = vpop.permute.xlu0 %714
      %716 = vrot.lane.b32.xlu0 %v672, 48
      %v717 = vpop.permute.xlu0 %716
      %718 = vrot.lane.b32.xlu0 %v675, 48
      %v719 = vpop.permute.xlu0 %718
      %720 = vrot.lane.b32.xlu0 %v678, 48
      %v721 = vpop.permute.xlu0 %720
      %722 = vrot.lane.b32.xlu0 %v681, 48
      %v723 = vpop.permute.xlu0 %722
      %724 = vrot.lane.b32.xlu0 %v684, 48
      %v725 = vpop.permute.xlu0 %724
      %726 = vrot.lane.b32.xlu0 %v687, 48
      %v727 = vpop.permute.xlu0 %726
      %728 = vrot.lane.b32.xlu0 %v690, 48
      %v729 = vpop.permute.xlu0 %728
      %730 = vrot.lane.b32.xlu0 %v693, 48
      %v731 = vpop.permute.xlu0 %730
      %732 = vrot.lane.b32.xlu0 %v696, 48
      %v733 = vpop.permute.xlu0 %732
      %734 = vrot.lane.b32.xlu0 %v699, 48
      %v735 = vpop.permute.xlu0 %734
      %736 = vrot.lane.b32.xlu0 %v702, 48
      %v737 = vpop.permute.xlu0 %736
      %738 = vrot.lane.b32.xlu0 %v705, 48
      %v739 = vpop.permute.xlu0 %738
      %740 = vrot.lane.b32.xlu0 %v708, 48
      %v741 = vpop.permute.xlu0 %740
      %742 = vrot.lane.b32.xlu0 %v711, 48
      %v743 = vpop.permute.xlu0 %742
      %vm744 = vcmask 195584
      %v746 = vsel %vm744, %v374, %v632
      %v748 = vsel %vm744, %v375, %v634
      %v750 = vsel %vm744, %v376, %v636
      %v752 = vsel %vm744, %v377, %v638
      %v754 = vsel %vm744, %v378, %v640
      %v756 = vsel %vm744, %v379, %v642
      %v758 = vsel %vm744, %v380, %v644
      %v760 = vsel %vm744, %v381, %v646
      %v762 = vsel %vm744, %v382, %v648
      %v764 = vsel %vm744, %v383, %v650
      %v766 = vsel %vm744, %v384, %v652
      %v768 = vsel %vm744, %v385, %v654
      %v770 = vsel %vm744, %v386, %v656
      %v772 = vsel %vm744, %v387, %v658
      %v774 = vsel %vm744, %v388, %v660
      %v776 = vsel %vm744, %v389, %v662
      %vm777 = vcmask 392192
      %v779 = vsel %vm777, %v746, %v713
      %v781 = vsel %vm777, %v748, %v715
      %v783 = vsel %vm777, %v750, %v717
      %v785 = vsel %vm777, %v752, %v719
      %v787 = vsel %vm777, %v754, %v721
      %v789 = vsel %vm777, %v756, %v723
      %v791 = vsel %vm777, %v758, %v725
      %v793 = vsel %vm777, %v760, %v727
      %v795 = vsel %vm777, %v762, %v729
      %v797 = vsel %vm777, %v764, %v731
      %v799 = vsel %vm777, %v766, %v733
      %v801 = vsel %vm777, %v768, %v735
      %v803 = vsel %vm777, %v770, %v737
      %v805 = vsel %vm777, %v772, %v739
      %v807 = vsel %vm777, %v774, %v741
      %v809 = vsel %vm777, %v776, %v743
      %v810 = vld [vmem:[%s1] sm:$0xf]
      %v811 = vld [vmem:[%s1 + $0x4] sm:$0xf]
      %v812 = vld [vmem:[%s1 + $0x8] sm:$0xf]
      %v813 = vld [vmem:[%s1 + $0xc] sm:$0xf]
      %v814 = vld [vmem:[%s1 + $0x10] sm:$0xf]
      %v815 = vld [vmem:[%s1 + $0x14] sm:$0xf]
      %v816 = vld [vmem:[%s1 + $0x18] sm:$0xf]
      %v817 = vld [vmem:[%s1 + $0x1c] sm:$0xf]
      %v818 = vld [vmem:[%s1 + $0x20] sm:$0xf]
      %v828 = vunpack.c.l.b16 %v810
      %v829 = vunpack.c.l.b16 %v811
      %v830 = vunpack.c.l.b16 %v812
      %v831 = vunpack.c.l.b16 %v813
      %v832 = vunpack.c.l.b16 %v814
      %v833 = vunpack.c.l.b16 %v815
      %v834 = vunpack.c.l.b16 %v816
      %v835 = vunpack.c.l.b16 %v817
      %v836 = vunpack.c.l.b16 %v818
      %v837 = vpack.c.b16 %v829, %v828
      %v838 = vpack.c.b16 %v831, %v830
      %v839 = vpack.c.b16 %v833, %v832
      %v840 = vpack.c.b16 %v835, %v834
      %v841 = vpack.c.b16 %v836, %v836
      %vm846 = vcmask 588800
      %v847 = vsel %vm846, %v779, 0
      %v849 = vsel %vm846, %v781, 0
      %v851 = vsel %vm846, %v783, 0
      %v853 = vsel %vm846, %v785, 0
      %v855 = vsel %vm846, %v787, 0
      %v857 = vsel %vm846, %v789, 0
      %v859 = vsel %vm846, %v791, 0
      %v861 = vsel %vm846, %v793, 0
      %v863 = vsel %vm846, %v795, 0
      %v865 = vsel %vm846, %v797, 0
      %v867 = vsel %vm846, %v799, 0
      %v869 = vsel %vm846, %v801, 0
      %v871 = vsel %vm846, %v803, 0
      %v873 = vsel %vm846, %v805, 0
      %v875 = vsel %vm846, %v807, 0
      %v877 = vsel %vm846, %v809, 0
      %vm879 = vcmask 1043456
      %v881 = vsel %vm879, %v841, 0
      %883 = vmatprep.subr.bf16.mxu0 0
      %884 = vmatpush1.bf16.msra.mxu0 %v837
      %885 = vmatprep.subr.bf16.mxu0 0
      %886 = vmatpush1.bf16.msra.mxu0 %v838
      %887 = vmatprep.subr.bf16.mxu0 0
      %888 = vmatpush1.bf16.msra.mxu0 %v839
      %889 = vmatprep.subr.bf16.mxu0 0
      %890 = vmatpush1.bf16.msra.mxu0 %v840
      %891 = vmatprep.subr.bf16.mxu0 0
      %892 = vmatpush1.bf16.msra.mxu0 %v881
      %893 = vmatprep.subr.bf16.mxu0 0
      %894 = vmatpush1.bf16.msra.mxu0 0
      %895 = vmatprep.subr.bf16.mxu0 0
      %896 = vmatpush1.bf16.msra.mxu0 0
      %897 = vmatprep.subr.bf16.mxu0 0
      %898 = vmatpush1.bf16.msra.mxu0 0
      %899 = vmatprep.subr.bf16.mxu0 0
      %900 = vmatpush1.bf16.msra.mxu0 0
      %901 = vmatprep.subr.bf16.mxu0 0
      %902 = vmatpush1.bf16.msra.mxu0 0
      %903 = vmatprep.subr.bf16.mxu0 0
      %904 = vmatpush1.bf16.msra.mxu0 0
      %905 = vmatprep.subr.bf16.mxu0 0
      %906 = vmatpush1.bf16.msra.mxu0 0
      %907 = vmatprep.subr.bf16.mxu0 0
      %908 = vmatpush1.bf16.msra.mxu0 0
      %909 = vmatprep.subr.bf16.mxu0 0
      %910 = vmatpush1.bf16.msra.mxu0 0
      %911 = vmatprep.subr.bf16.mxu0 0
      %912 = vmatpush1.bf16.msra.mxu0 0
      %913 = vmatprep.subr.bf16.mxu0 0
      %914 = vmatpush1.bf16.msra.mxu0 0
      %915 = vmatprep.mubr.bf16.mxu0 0
      %916 = vmatmul.mubr.bf16.gmra.mrb[0].mxu0 %v847
      %v917 = vpop.f32.mrb[0].mxu0
      %v918 = vadd.f32 0.0, %v917
      %v919 = vpop.f32.mrb[0].mxu0
      %v920 = vpop.f32.mrb[0].mxu0
      %v921 = vadd.f32 0.0, %v920
      %v922 = vpop.f32.mrb[0].mxu0
      %923 = vmatprep.mubr.bf16.mxu0 0
      %924 = vmatmul.mubr.bf16.gmra.mrb[0].mxu0 %v849
      %v925 = vpop.f32.mrb[0].mxu0
      %v926 = vadd.f32 0.0, %v925
      %v927 = vpop.f32.mrb[0].mxu0
      %v928 = vpop.f32.mrb[0].mxu0
      %v929 = vadd.f32 0.0, %v928
      %v930 = vpop.f32.mrb[0].mxu0
      %931 = vmatprep.mubr.bf16.mxu0 0
      %932 = vmatmul.mubr.bf16.gmra.mrb[0].mxu0 %v851
      %v933 = vpop.f32.mrb[0].mxu0
      %v934 = vadd.f32 0.0, %v933
      %v935 = vpop.f32.mrb[0].mxu0
      %v936 = vpop.f32.mrb[0].mxu0
      %v937 = vadd.f32 0.0, %v936
      %v938 = vpop.f32.mrb[0].mxu0
      %939 = vmatprep.mubr.bf16.mxu0 0
      %940 = vmatmul.mubr.bf16.gmra.mrb[0].mxu0 %v853
      %v941 = vpop.f32.mrb[0].mxu0
      %v942 = vadd.f32 0.0, %v941
      %v943 = vpop.f32.mrb[0].mxu0
      %v944 = vpop.f32.mrb[0].mxu0
      %v945 = vadd.f32 0.0, %v944
      %v946 = vpop.f32.mrb[0].mxu0
      %947 = vmatprep.mubr.bf16.mxu0 0
      %948 = vmatmul.mubr.bf16.gmra.mrb[0].mxu0 %v855
      %v949 = vpop.f32.mrb[0].mxu0
      %v950 = vadd.f32 0.0, %v949
      %v951 = vpop.f32.mrb[0].mxu0
      %v952 = vpop.f32.mrb[0].mxu0
      %v953 = vadd.f32 0.0, %v952
      %v954 = vpop.f32.mrb[0].mxu0
      %955 = vmatprep.mubr.bf16.mxu0 0
      %956 = vmatmul.mubr.bf16.gmra.mrb[0].mxu0 %v857
      %v957 = vpop.f32.mrb[0].mxu0
      %v958 = vadd.f32 0.0, %v957
      %v959 = vpop.f32.mrb[0].mxu0
      %v960 = vpop.f32.mrb[0].mxu0
      %v961 = vadd.f32 0.0, %v960
      %v962 = vpop.f32.mrb[0].mxu0
      %963 = vmatprep.mubr.bf16.mxu0 0
      %964 = vmatmul.mubr.bf16.gmra.mrb[0].mxu0 %v859
      %v965 = vpop.f32.mrb[0].mxu0
      %v966 = vadd.f32 0.0, %v965
      %v967 = vpop.f32.mrb[0].mxu0
      %v968 = vpop.f32.mrb[0].mxu0
      %v969 = vadd.f32 0.0, %v968
      %v970 = vpop.f32.mrb[0].mxu0
      %971 = vmatprep.mubr.bf16.mxu0 0
      %972 = vmatmul.mubr.bf16.gmra.mrb[0].mxu0 %v861
      %v973 = vpop.f32.mrb[0].mxu0
      %v974 = vadd.f32 0.0, %v973
      %v975 = vpop.f32.mrb[0].mxu0
      %v976 = vpop.f32.mrb[0].mxu0
      %v977 = vadd.f32 0.0, %v976
      %v978 = vpop.f32.mrb[0].mxu0
      %979 = vmatprep.mubr.bf16.mxu0 0
      %980 = vmatmul.mubr.bf16.gmra.mrb[0].mxu0 %v863
      %v981 = vpop.f32.mrb[0].mxu0
      %v982 = vadd.f32 0.0, %v981
      %v983 = vpop.f32.mrb[0].mxu0
      %v984 = vpop.f32.mrb[0].mxu0
      %v985 = vadd.f32 0.0, %v984
      %v986 = vpop.f32.mrb[0].mxu0
      %987 = vmatprep.mubr.bf16.mxu0 0
      %988 = vmatmul.mubr.bf16.gmra.mrb[0].mxu0 %v865
      %v989 = vpop.f32.mrb[0].mxu0
      %v990 = vadd.f32 0.0, %v989
      %v991 = vpop.f32.mrb[0].mxu0
      %v992 = vpop.f32.mrb[0].mxu0
      %v993 = vadd.f32 0.0, %v992
      %v994 = vpop.f32.mrb[0].mxu0
      %995 = vmatprep.mubr.bf16.mxu0 0
      %996 = vmatmul.mubr.bf16.gmra.mrb[0].mxu0 %v867
      %v997 = vpop.f32.mrb[0].mxu0
      %v998 = vadd.f32 0.0, %v997
      %v999 = vpop.f32.mrb[0].mxu0
      %v1000 = vpop.f32.mrb[0].mxu0
      %v1001 = vadd.f32 0.0, %v1000
      %v1002 = vpop.f32.mrb[0].mxu0
      %1003 = vmatprep.mubr.bf16.mxu0 0
      %1004 = vmatmul.mubr.bf16.gmra.mrb[0].mxu0 %v869
      %v1005 = vpop.f32.mrb[0].mxu0
      %v1006 = vadd.f32 0.0, %v1005
      %v1007 = vpop.f32.mrb[0].mxu0
      %v1008 = vpop.f32.mrb[0].mxu0
      %v1009 = vadd.f32 0.0, %v1008
      %v1010 = vpop.f32.mrb[0].mxu0
      %1011 = vmatprep.mubr.bf16.mxu0 0
      %1012 = vmatmul.mubr.bf16.gmra.mrb[0].mxu0 %v871
      %v1013 = vpop.f32.mrb[0].mxu0
      %v1014 = vadd.f32 0.0, %v1013
      %v1015 = vpop.f32.mrb[0].mxu0
      %v1016 = vpop.f32.mrb[0].mxu0
      %v1017 = vadd.f32 0.0, %v1016
      %v1018 = vpop.f32.mrb[0].mxu0
      %1019 = vmatprep.mubr.bf16.mxu0 0
      %1020 = vmatmul.mubr.bf16.gmra.mrb[0].mxu0 %v873
      %v1021 = vpop.f32.mrb[0].mxu0
      %v1022 = vadd.f32 0.0, %v1021
      %v1023 = vpop.f32.mrb[0].mxu0
      %v1024 = vpop.f32.mrb[0].mxu0
      %v1025 = vadd.f32 0.0, %v1024
      %v1026 = vpop.f32.mrb[0].mxu0
      %1027 = vmatprep.mubr.bf16.mxu0 0
      %1028 = vmatmul.mubr.bf16.gmra.mrb[0].mxu0 %v875
      %v1029 = vpop.f32.mrb[0].mxu0
      %v1030 = vadd.f32 0.0, %v1029
      %v1031 = vpop.f32.mrb[0].mxu0
      %v1032 = vpop.f32.mrb[0].mxu0
      %v1033 = vadd.f32 0.0, %v1032
      %v1034 = vpop.f32.mrb[0].mxu0
      %1035 = vmatprep.mubr.bf16.mxu0 0
      %1036 = vmatmul.mubr.bf16.gmra.mrb[0].mxu0 %v877
      %v1037 = vpop.f32.mrb[0].mxu0
      %v1038 = vadd.f32 0.0, %v1037
      %v1039 = vpop.f32.mrb[0].mxu0
      %v1040 = vpop.f32.mrb[0].mxu0
      %v1041 = vadd.f32 0.0, %v1040
      %v1042 = vpop.f32.mrb[0].mxu0
      %1043 = vdwg.mxu0
      %v1044 = vpack.c.bf16 %v921, %v918
      %v1045 = vpack.c.bf16 %v929, %v926
      %v1046 = vpack.c.bf16 %v937, %v934
      %v1047 = vpack.c.bf16 %v945, %v942
      %v1048 = vpack.c.bf16 %v953, %v950
      %v1049 = vpack.c.bf16 %v961, %v958
      %v1050 = vpack.c.bf16 %v969, %v966
      %v1051 = vpack.c.bf16 %v977, %v974
      %v1052 = vpack.c.bf16 %v985, %v982
      %v1053 = vpack.c.bf16 %v993, %v990
      %v1054 = vpack.c.bf16 %v1001, %v998
      %v1055 = vpack.c.bf16 %v1009, %v1006
      %v1056 = vpack.c.bf16 %v1017, %v1014
      %v1057 = vpack.c.bf16 %v1025, %v1022
      %v1058 = vpack.c.bf16 %v1033, %v1030
      %v1059 = vpack.c.bf16 %v1041, %v1038
      %v1076 = vunpack.c.l.b16 %v1044
      %v1077 = vunpack.c.h.b16 %v1044
      %v1078 = vunpack.c.l.b16 %v1045
      %v1079 = vunpack.c.h.b16 %v1045
      %v1080 = vunpack.c.l.b16 %v1046
      %v1081 = vunpack.c.h.b16 %v1046
      %v1082 = vunpack.c.l.b16 %v1047
      %v1083 = vunpack.c.h.b16 %v1047
      %v1084 = vunpack.c.l.b16 %v1048
      %v1085 = vunpack.c.h.b16 %v1048
      %v1086 = vunpack.c.l.b16 %v1049
      %v1087 = vunpack.c.h.b16 %v1049
      %v1088 = vunpack.c.l.b16 %v1050
      %v1089 = vunpack.c.h.b16 %v1050
      %v1090 = vunpack.c.l.b16 %v1051
      %v1091 = vunpack.c.h.b16 %v1051
      %v1092 = vunpack.c.l.b16 %v1052
      %v1093 = vunpack.c.h.b16 %v1052
      %v1094 = vunpack.c.l.b16 %v1053
      %v1095 = vunpack.c.h.b16 %v1053
      %v1096 = vunpack.c.l.b16 %v1054
      %v1097 = vunpack.c.h.b16 %v1054
      %v1098 = vunpack.c.l.b16 %v1055
      %v1099 = vunpack.c.h.b16 %v1055
      %v1100 = vunpack.c.l.b16 %v1056
      %v1101 = vunpack.c.h.b16 %v1056
      %v1102 = vunpack.c.l.b16 %v1057
      %v1103 = vunpack.c.h.b16 %v1057
      %v1104 = vunpack.c.l.b16 %v1058
      %v1105 = vunpack.c.h.b16 %v1058
      %v1106 = vunpack.c.l.b16 %v1059
      %v1107 = vunpack.c.h.b16 %v1059
      %v1108 = vpack.c.b16 %v1076, %v1076
      %v1109 = vpack.c.b16 %v1077, %v1077
      %v1110 = vpack.c.b16 %v1078, %v1078
      %v1111 = vpack.c.b16 %v1079, %v1079
      %v1112 = vpack.c.b16 %v1080, %v1080
      %v1113 = vpack.c.b16 %v1081, %v1081
      %v1114 = vpack.c.b16 %v1082, %v1082
      %v1115 = vpack.c.b16 %v1083, %v1083
      %v1116 = vpack.c.b16 %v1084, %v1084
      %v1117 = vpack.c.b16 %v1085, %v1085
      %v1118 = vpack.c.b16 %v1086, %v1086
      %v1119 = vpack.c.b16 %v1087, %v1087
      %v1120 = vpack.c.b16 %v1088, %v1088
      %v1121 = vpack.c.b16 %v1089, %v1089
      %v1122 = vpack.c.b16 %v1090, %v1090
      %v1123 = vpack.c.b16 %v1091, %v1091
      %v1124 = vpack.c.b16 %v1092, %v1092
      %v1125 = vpack.c.b16 %v1093, %v1093
      %v1126 = vpack.c.b16 %v1094, %v1094
      %v1127 = vpack.c.b16 %v1095, %v1095
      %v1128 = vpack.c.b16 %v1096, %v1096
      %v1129 = vpack.c.b16 %v1097, %v1097
      %v1130 = vpack.c.b16 %v1098, %v1098
      %v1131 = vpack.c.b16 %v1099, %v1099
      %v1132 = vpack.c.b16 %v1100, %v1100
      %v1133 = vpack.c.b16 %v1101, %v1101
      %v1134 = vpack.c.b16 %v1102, %v1102
      %v1135 = vpack.c.b16 %v1103, %v1103
      %v1136 = vpack.c.b16 %v1104, %v1104
      %v1137 = vpack.c.b16 %v1105, %v1105
      %v1138 = vpack.c.b16 %v1106, %v1106
      %v1139 = vpack.c.b16 %v1107, %v1107
      %1172 = vst [vmem:[%s249] sm:$0xf] %v1108
      %1173 = vst [vmem:[%s249 + $0x4] sm:$0xf] %v1109
      %1174 = vst [vmem:[%s249 + $0x8] sm:$0xf] %v1110
      %1175 = vst [vmem:[%s249 + $0xc] sm:$0xf] %v1111
      %1176 = vst [vmem:[%s249 + $0x10] sm:$0xf] %v1112
      %1177 = vst [vmem:[%s249 + $0x14] sm:$0xf] %v1113
      %1178 = vst [vmem:[%s249 + $0x18] sm:$0xf] %v1114
      %1179 = vst [vmem:[%s249 + $0x1c] sm:$0xf] %v1115
      %1180 = vst [vmem:[%s249 + $0x20] sm:$0xf] %v1116
      %1181 = vst [vmem:[%s249 + $0x24] sm:$0xf] %v1117
      %1182 = vst [vmem:[%s249 + $0x28] sm:$0xf] %v1118
      %1183 = vst [vmem:[%s249 + $0x2c] sm:$0xf] %v1119
      %1184 = vst [vmem:[%s249 + $0x30] sm:$0xf] %v1120
      %1185 = vst [vmem:[%s249 + $0x34] sm:$0xf] %v1121
      %1186 = vst [vmem:[%s249 + $0x38] sm:$0xf] %v1122
      %1187 = vst [vmem:[%s249 + $0x3c] sm:$0xf] %v1123
      %1188 = vst [vmem:[%s249 + $0x40] sm:$0xf] %v1124
      %1189 = vst [vmem:[%s249 + $0x44] sm:$0xf] %v1125
      %1190 = vst [vmem:[%s249 + $0x48] sm:$0xf] %v1126
      %1191 = vst [vmem:[%s249 + $0x4c] sm:$0xf] %v1127
      %1192 = vst [vmem:[%s249 + $0x50] sm:$0xf] %v1128
      %1193 = vst [vmem:[%s249 + $0x54] sm:$0xf] %v1129
      %1194 = vst [vmem:[%s249 + $0x58] sm:$0xf] %v1130
      %1195 = vst [vmem:[%s249 + $0x5c] sm:$0xf] %v1131
      %1196 = vst [vmem:[%s249 + $0x60] sm:$0xf] %v1132
      %1197 = vst [vmem:[%s249 + $0x64] sm:$0xf] %v1133
      %1198 = vst [vmem:[%s249 + $0x68] sm:$0xf] %v1134
      %1199 = vst [vmem:[%s249 + $0x6c] sm:$0xf] %v1135
      %1200 = vst [vmem:[%s249 + $0x70] sm:$0xf] %v1136
      %1201 = vst [vmem:[%s249 + $0x74] sm:$0xf] %v1137
      %1202 = vst [vmem:[%s249 + $0x78] sm:$0xf] %v1138
      %1203 = vst [vmem:[%s249 + $0x7c] sm:$0xf] %v1139
      %v1204 = vadd.f32 %v918, %v921
      %v1205 = vadd.f32 %v1204, %v926
      %v1206 = vadd.f32 %v1205, %v929
      %v1207 = vadd.f32 %v1206, %v934
      %v1208 = vadd.f32 %v1207, %v937
      %v1209 = vadd.f32 %v1208, %v942
      %v1210 = vadd.f32 %v1209, %v945
      %v1211 = vadd.f32 %v1210, %v950
      %v1212 = vadd.f32 %v1211, %v953
      %v1213 = vadd.f32 %v1212, %v958
      %v1214 = vadd.f32 %v1213, %v961
      %v1215 = vadd.f32 %v1214, %v966
      %v1216 = vadd.f32 %v1215, %v969
      %v1217 = vadd.f32 %v1216, %v974
      %v1218 = vadd.f32 %v1217, %v977
      %v1219 = vadd.f32 %v1218, %v982
      %v1220 = vadd.f32 %v1219, %v985
      %v1221 = vadd.f32 %v1220, %v990
      %v1222 = vadd.f32 %v1221, %v993
      %v1223 = vadd.f32 %v1222, %v998
      %v1224 = vadd.f32 %v1223, %v1001
      %v1225 = vadd.f32 %v1224, %v1006
      %v1226 = vadd.f32 %v1225, %v1009
      %v1227 = vadd.f32 %v1226, %v1014
      %v1228 = vadd.f32 %v1227, %v1017
      %v1229 = vadd.f32 %v1228, %v1022
      %v1230 = vadd.f32 %v1229, %v1025
      %v1231 = vadd.f32 %v1230, %v1030
      %v1232 = vadd.f32 %v1231, %v1033
      %v1233 = vadd.f32 %v1232, %v1038
      %v1234 = vadd.f32 %v1233, %v1041
      %v1235 = vrot.slane %v1234, 4
      %v1236 = vadd.f32 %v1234, %v1235
      %v1237 = vrot.slane %v1236, 2
      %v1238 = vadd.f32 %v1236, %v1237
      %v1239 = vrot.slane %v1238, 1
      %v1240 = vadd.f32 %v1238, %v1239
      %1241 = vst [vmem:[%s254] sm:$0x1] %v1240
      %v1242 = vmul.f32 %v918, %v918
      %v1243 = vmul.f32 %v921, %v921
      %v1244 = vmul.f32 %v926, %v926
      %v1245 = vmul.f32 %v929, %v929
      %v1246 = vmul.f32 %v934, %v934
      %v1247 = vmul.f32 %v937, %v937
      %v1248 = vmul.f32 %v942, %v942
      %v1249 = vmul.f32 %v945, %v945
      %v1250 = vmul.f32 %v950, %v950
      %v1251 = vmul.f32 %v953, %v953
      %v1252 = vmul.f32 %v958, %v958
      %v1253 = vmul.f32 %v961, %v961
      %v1254 = vmul.f32 %v966, %v966
      %v1255 = vmul.f32 %v969, %v969
      %v1256 = vmul.f32 %v974, %v974
      %v1257 = vmul.f32 %v977, %v977
      %v1258 = vmul.f32 %v982, %v982
      %v1259 = vmul.f32 %v985, %v985
      %v1260 = vmul.f32 %v990, %v990
      %v1261 = vmul.f32 %v993, %v993
      %v1262 = vmul.f32 %v998, %v998
      %v1263 = vmul.f32 %v1001, %v1001
      %v1264 = vmul.f32 %v1006, %v1006
      %v1265 = vmul.f32 %v1009, %v1009
      %v1266 = vmul.f32 %v1014, %v1014
      %v1267 = vmul.f32 %v1017, %v1017
      %v1268 = vmul.f32 %v1022, %v1022
      %v1269 = vmul.f32 %v1025, %v1025
      %v1270 = vmul.f32 %v1030, %v1030
      %v1271 = vmul.f32 %v1033, %v1033
      %v1272 = vmul.f32 %v1038, %v1038
      %v1273 = vmul.f32 %v1041, %v1041
      %v1274 = vadd.f32 %v1242, %v1243
      %v1275 = vadd.f32 %v1274, %v1244
      %v1276 = vadd.f32 %v1275, %v1245
      %v1277 = vadd.f32 %v1276, %v1246
      %v1278 = vadd.f32 %v1277, %v1247
      %v1279 = vadd.f32 %v1278, %v1248
      %v1280 = vadd.f32 %v1279, %v1249
      %v1281 = vadd.f32 %v1280, %v1250
      %v1282 = vadd.f32 %v1281, %v1251
      %v1283 = vadd.f32 %v1282, %v1252
      %v1284 = vadd.f32 %v1283, %v1253
      %v1285 = vadd.f32 %v1284, %v1254
      %v1286 = vadd.f32 %v1285, %v1255
      %v1287 = vadd.f32 %v1286, %v1256
      %v1288 = vadd.f32 %v1287, %v1257
      %v1289 = vadd.f32 %v1288, %v1258
      %v1290 = vadd.f32 %v1289, %v1259
      %v1291 = vadd.f32 %v1290, %v1260
      %v1292 = vadd.f32 %v1291, %v1261
      %v1293 = vadd.f32 %v1292, %v1262
      %v1294 = vadd.f32 %v1293, %v1263
      %v1295 = vadd.f32 %v1294, %v1264
      %v1296 = vadd.f32 %v1295, %v1265
      %v1297 = vadd.f32 %v1296, %v1266
      %v1298 = vadd.f32 %v1297, %v1267
      %v1299 = vadd.f32 %v1298, %v1268
      %v1300 = vadd.f32 %v1299, %v1269
      %v1301 = vadd.f32 %v1300, %v1270
      %v1302 = vadd.f32 %v1301, %v1271
      %v1303 = vadd.f32 %v1302, %v1272
      %v1304 = vadd.f32 %v1303, %v1273
      %v1305 = vrot.slane %v1304, 4
      %v1306 = vadd.f32 %v1304, %v1305
      %v1307 = vrot.slane %v1306, 2
      %v1308 = vadd.f32 %v1306, %v1307
      %v1309 = vrot.slane %v1308, 1
      %v1310 = vadd.f32 %v1308, %v1309
      %1311 = vst [vmem:[%s259] sm:$0x1] %v1310
      %s1312 = sadd.s32 %s20, %s21
      %p1313 = scmp.lt.s32.totalorder %s1312, 1
      %s1314 = scalar_select %p1313, %s1312, 1
      %s1315 = smul.addr %s1314, 32
      %s1316 = smul.addr %s1315, 4
      %s1317 = scalar_lea.vmem %s2, %s1316
      %s1318 = sadd.s32 %s20, %s21
      %p1319 = scmp.lt.s32.totalorder %s1318, 1
      %s1320 = scalar_select %p1319, %s1318, 1
      %s1321 = scalar_lea.vmem %s3, %s1320
      %s1322 = sadd.s32 %s20, %s21
      %p1323 = scmp.lt.s32.totalorder %s1322, 1
      %s1324 = scalar_select %p1323, %s1322, 1
      %s1325 = scalar_lea.vmem %s4, %s1324
      // Predicated region
      $region29: #{double_conv.4} parent=27 // pred_check
        %p1326 = pneg %p97
      $region30: #{double_conv.4} parent=27 // pred_check_branch
        %1328 = sbr.rel (%p1326) target = $region32
      $region31: #{double_conv.4} parent=27 // pred_region
        %s1329 = sadd.s32 %s20, %s21
      $region32: #{double_conv.4} parent=27 // pred_fallthru
        _
      // Predicated region
      $region33: #{double_conv.4} parent=27 // pred_check
        %p1330 = pneg %p125
      $region34: #{double_conv.4} parent=27 // pred_check_branch
        %1332 = sbr.rel (%p1330) target = $region36
      $region35: #{double_conv.4} parent=27 // pred_region
        %s1333 = sadd.s32 %s20, %s21
      $region36: #{double_conv.4} parent=27 // pred_fallthru
        _
      // Predicated region
      $region37: #{double_conv.4} parent=27 // pred_check
        %p1334 = pneg %p153
      $region38: #{double_conv.4} parent=27 // pred_check_branch
        %1336 = sbr.rel (%p1334) target = $region40
      $region39: #{double_conv.4} parent=27 // pred_region
        %s1337 = sadd.s32 %s20, %s21
      $region40: #{double_conv.4} parent=27 // pred_fallthru
        _
    $region28: #{double_conv.4} parent=5 // pred_fallthru
      _
    %p1338 = scmp.le.s32.totalorder 2, %s11
    // Predicated region
    $region41: #{double_conv.4} parent=5 // pred_check
      %p1339 = pneg %p1338
    $region42: #{double_conv.4} parent=5 // pred_check_branch
      %1341 = sbr.rel (%p1339) target = $region44
    $region43: #{double_conv.4} parent=5 // pred_region
      %s1342 = ssub.s32 %s11, 2
      // Predicated region
      $region45: #{double_conv.4} parent=43 // pred_check
        %p1343 = pneg %p103
      $region46: #{double_conv.4} parent=43 // pred_check_branch
        %1345 = sbr.rel (%p1343) target = $region48
      $region47: #{double_conv.4} parent=43 // pred_region
        %s1346 = sadd.s32 %s22, %s23
        %p1347 = scmp.lt.s32.totalorder %s1346, 1
        %s1348 = scalar_select %p1347, %s1346, 1
        %s1349 = smul.addr %s1348, 32
        %s1350 = smul.addr %s1349, 4
        %s1351 = scalar_lea.vmem %s2, %s1350
      $region48: #{double_conv.4} parent=43 // pred_fallthru
        _
      // Predicated region
      $region49: #{double_conv.4} parent=43 // pred_check
        %p1352 = pneg %p131
      $region50: #{double_conv.4} parent=43 // pred_check_branch
        %1354 = sbr.rel (%p1352) target = $region52
      $region51: #{double_conv.4} parent=43 // pred_region
        %s1355 = sadd.s32 %s22, %s23
        %p1356 = scmp.lt.s32.totalorder %s1355, 1
        %s1357 = scalar_select %p1356, %s1355, 1
        %s1358 = scalar_lea.vmem %s3, %s1357
      $region52: #{double_conv.4} parent=43 // pred_fallthru
        _
      // Predicated region
      $region53: #{double_conv.4} parent=43 // pred_check
        %p1359 = pneg %p159
      $region54: #{double_conv.4} parent=43 // pred_check_branch
        %1361 = sbr.rel (%p1359) target = $region56
      $region55: #{double_conv.4} parent=43 // pred_region
        %s1362 = sadd.s32 %s22, %s23
        %p1363 = scmp.lt.s32.totalorder %s1362, 1
        %s1364 = scalar_select %p1363, %s1362, 1
        %s1365 = scalar_lea.vmem %s4, %s1364
      $region56: #{double_conv.4} parent=43 // pred_fallthru
        _
    $region44: #{double_conv.4} parent=5 // pred_fallthru
      _
  $region6: #{double_conv.4} parent=0 // loop_footer
    %s15 = sadd.s32 1, %s11
  $region7: #{double_conv.4} parent=0 // loop_footer_branch
    %10 = sbr.rel target = $region3
  $region8: #{double_conv.4} parent=0 // loop_exit
    _

</llo_original>
